<compile_context>
chip_gen: v5e
topology: v5e:2x2
jax: 0.10.0
libtpu: 0.0.40
codegen_flags: <defaults>
</compile_context>

<pallas_src>
import jax
import jax.numpy as jnp
from jax.experimental import pallas as pl
from jax.experimental.pallas import tpu as pltpu


def _critic_kernel(s_ref, a_ref, w1s_ref, w1a_ref, b1_ref,
                   w2_ref, b2_ref, w3_ref, b3_ref, o_ref):
    """Fused 3-layer critic MLP: relu([s,a]W1+b1) -> relu(.W2+b2) -> .W3+b3."""
    # bf16 MXU operands, f32 accumulation, f32 elementwise (v5e-safe).
    s = s_ref[...].astype(jnp.bfloat16)
    a = a_ref[...].astype(jnp.bfloat16)

    # fc1 on the virtual concat [s, a]: split-K over the two inputs.
    h1 = (jnp.dot(s, w1s_ref[...], preferred_element_type=jnp.float32)
          + jnp.dot(a, w1a_ref[...], preferred_element_type=jnp.float32)
          + b1_ref[...])
    h1 = jnp.maximum(h1, 0.0)

    h2 = jnp.dot(h1.astype(jnp.bfloat16), w2_ref[...],
                 preferred_element_type=jnp.float32) + b2_ref[...]
    h2 = jnp.maximum(h2, 0.0)

    q = jnp.dot(h2.astype(jnp.bfloat16), w3_ref[...],
                preferred_element_type=jnp.float32) + b3_ref[...]

    o_ref[...] = q.astype(o_ref.dtype)


def _round_up(x, m):
    return ((x + m - 1) // m) * m


def _choose_batch_tile(batch, batch_tile):
    """Multiple-of-16 batch tile; even tile count when >1 tile (v7x megacore)."""
    tb = max(16, min(_round_up(batch_tile, 16), _round_up(batch, 16)))
    n_tiles = -(-batch // tb)
    if n_tiles > 1 and n_tiles % 2 == 1:
        # Rebalance onto an even tile count so both v7x TensorCores get work.
        n_tiles += 1
        tb = max(16, _round_up(-(-batch // n_tiles), 16))
    return tb


def critic_forward(state, action, params, *, batch_tile=256):
    """Run the fused Critic MLP Pallas kernel.

    state:  (B, state_dim)  float32
    action: (B, action_dim) float32
    params: dict with w1 (S+A, 1024), b1 (1, 1024),
                      w2 (1024, 512), b2 (1, 512),
                      w3 (512, 1),    b3 (1, 1)    -- all float32
    returns (B, 1) float32 Q-values.
    """
    B, S = state.shape
    A = action.shape[1]
    state = state.astype(jnp.float32)
    action = action.astype(jnp.float32)

    # bf16 weights for the MXU / halved weight DMA; biases stay f32.
    w1 = params["w1"]
    w1s = w1[:S, :].astype(jnp.bfloat16)      # fc1 slice applied to `state`
    w1a = w1[S:, :].astype(jnp.bfloat16)      # fc1 slice applied to `action`
    w2 = params["w2"].astype(jnp.bfloat16)
    w3 = params["w3"].astype(jnp.bfloat16)
    b1 = params["b1"].astype(jnp.float32).reshape(1, -1)
    b2 = params["b2"].astype(jnp.float32).reshape(1, -1)
    b3 = params["b3"].astype(jnp.float32).reshape(1, -1)

    # Pad the scalar output head to a lane-dense width of 128.
    OUT_PAD = 128
    w3p = jnp.zeros((w3.shape[0], OUT_PAD), w3.dtype).at[:, :1].set(w3)
    b3p = jnp.zeros((1, OUT_PAD), b3.dtype).at[:, :1].set(b3)

    tb = _choose_batch_tile(B, batch_tile)
    Bp = _round_up(B, tb)
    if Bp != B:
        state = jnp.pad(state, ((0, Bp - B), (0, 0)))
        action = jnp.pad(action, ((0, Bp - B), (0, 0)))

    grid = (Bp // tb,)
    vmem_limit = (32 << 20) if tb >= 384 else (16 << 20)

    out = pl.pallas_call(
        _critic_kernel,
        out_shape=jax.ShapeDtypeStruct((Bp, OUT_PAD), jnp.float32),
        grid=grid,
        in_specs=[
            pl.BlockSpec((tb, S), lambda i: (i, 0)),       # state: tiled over batch
            pl.BlockSpec((tb, A), lambda i: (i, 0)),       # action: tiled over batch
            pl.BlockSpec(w1s.shape, lambda i: (0, 0)),     # weights/biases: resident
            pl.BlockSpec(w1a.shape, lambda i: (0, 0)),
            pl.BlockSpec(b1.shape, lambda i: (0, 0)),
            pl.BlockSpec(w2.shape, lambda i: (0, 0)),
            pl.BlockSpec(b2.shape, lambda i: (0, 0)),
            pl.BlockSpec(w3p.shape, lambda i: (0, 0)),
            pl.BlockSpec(b3p.shape, lambda i: (0, 0)),
        ],
        out_specs=pl.BlockSpec((tb, OUT_PAD), lambda i: (i, 0)),
        compiler_params=pltpu.CompilerParams(
            dimension_semantics=("parallel",),   # v7x: shard batch tiles across both TCs
            vmem_limit_bytes=vmem_limit,
        ),
    )(state, action, w1s, w1a, b1, w2, b2, w3p, b3p)

    return out[:B, :1]


def init_critic_params(key, state_dim, action_dim):
    """Deterministic synthetic init mimicking nn.Linear fan-in uniform bounds."""
    k1, k2, k3, k4, k5, k6 = jax.random.split(key, 6)
    in1 = state_dim + action_dim

    def uni(k, shape, fan_in):
        bound = 1.0 / jnp.sqrt(float(fan_in))
        return jax.random.uniform(k, shape, jnp.float32, -bound, bound)

    return {
        "w1": uni(k1, (in1, 1024), in1),
        "b1": uni(k2, (1, 1024), in1),
        "w2": uni(k3, (1024, 512), 1024),
        "b2": uni(k4, (1, 512), 1024),
        "w3": uni(k5, (512, 1), 512),
        "b3": uni(k6, (1, 1), 512),
    }


def critic_reference_f32(state, action, params):
    """Pure-f32 JAX reference (matches the PyTorch module's semantics)."""
    x = jnp.concatenate([state, action], axis=1)
    h1 = jnp.maximum(x @ params["w1"] + params["b1"], 0.0)
    h2 = jnp.maximum(h1 @ params["w2"] + params["b2"], 0.0)
    return h2 @ params["w3"] + params["b3"]


def critic_reference_mixed(state, action, params):
    """Reference matching the kernel's bf16-operand / f32-accumulate / split-W1 numerics."""
    S = state.shape[1]
    w1s = params["w1"][:S, :].astype(jnp.bfloat16)
    w1a = params["w1"][S:, :].astype(jnp.bfloat16)
    h1 = (jnp.dot(state.astype(jnp.bfloat16), w1s, preferred_element_type=jnp.float32)
          + jnp.dot(action.astype(jnp.bfloat16), w1a, preferred_element_type=jnp.float32)
          + params["b1"])
    h1 = jnp.maximum(h1, 0.0)
    h2 = jnp.dot(h1.astype(jnp.bfloat16), params["w2"].astype(jnp.bfloat16),
                 preferred_element_type=jnp.float32) + params["b2"]
    h2 = jnp.maximum(h2, 0.0)
    return jnp.dot(h2.astype(jnp.bfloat16), params["w3"].astype(jnp.bfloat16),
                   preferred_element_type=jnp.float32) + params["b3"]


if __name__ == "__main__":
    batch = 2
    state_dim = 16
    action_dim = 4

    key = jax.random.PRNGKey(0)
    key_p, key_s, key_a = jax.random.split(key, 3)

    params = init_critic_params(key_p, state_dim, action_dim)
    state = jax.random.normal(key_s, (batch, state_dim), dtype=jnp.float32)
    action = jax.random.normal(key_a, (batch, action_dim), dtype=jnp.float32)

    out = critic_forward(state, action, params)
    out = jax.block_until_ready(out)

    assert out.shape == (batch, 1)

    ref_mixed = critic_reference_mixed(state, action, params)
    ref_f32 = critic_reference_f32(state, action, params)

    # Tight check vs. numerics-matched (bf16 operand, split-W1) reference.
    assert jnp.allclose(out, ref_mixed, atol=2e-3, rtol=2e-3), (out, ref_mixed)
    # Loose semantic check vs. pure-f32 reference (bf16 weight rounding).
    assert jnp.allclose(out, ref_f32, atol=5e-2, rtol=5e-2), (out, ref_f32)

    print("KERNEL_OK")
</pallas_src>

<mosaic_0001>
module attributes {stable_mosaic.version = 11 : i64} {
  func.func @_critic_kernel(%arg0: i32, %arg1: memref<16x16xf32, #tpu.memory_space<vmem>>, %arg2: memref<16x4xf32, #tpu.memory_space<vmem>>, %arg3: memref<16x1024xbf16, #tpu.memory_space<vmem>>, %arg4: memref<4x1024xbf16, #tpu.memory_space<vmem>>, %arg5: memref<1x1024xf32, #tpu.memory_space<vmem>>, %arg6: memref<1024x512xbf16, #tpu.memory_space<vmem>>, %arg7: memref<1x512xf32, #tpu.memory_space<vmem>>, %arg8: memref<512x128xbf16, #tpu.memory_space<vmem>>, %arg9: memref<1x128xf32, #tpu.memory_space<vmem>>, %arg10: memref<16x128xf32, #tpu.memory_space<vmem>>) attributes {dimension_semantics = [#tpu.dimension_semantics<parallel>], iteration_bounds = array<i64: 1>, scalar_prefetch = 0 : i64, scratch_operands = 0 : i64, tpu.core_type = #tpu.core_type<tc>, window_params = [{transform_indices = @transform_0, window_bounds = array<i64: 16, 16>}, {transform_indices = @transform_1, window_bounds = array<i64: 16, 4>}, {pipeline_mode = #tpu.pipeline_mode<synchronous>, transform_indices = @transform_2, window_bounds = array<i64: 16, 1024>}, {pipeline_mode = #tpu.pipeline_mode<synchronous>, transform_indices = @transform_3, window_bounds = array<i64: 4, 1024>}, {pipeline_mode = #tpu.pipeline_mode<synchronous>, transform_indices = @transform_4, window_bounds = array<i64: 1, 1024>}, {pipeline_mode = #tpu.pipeline_mode<synchronous>, transform_indices = @transform_5, window_bounds = array<i64: 1024, 512>}, {pipeline_mode = #tpu.pipeline_mode<synchronous>, transform_indices = @transform_6, window_bounds = array<i64: 1, 512>}, {pipeline_mode = #tpu.pipeline_mode<synchronous>, transform_indices = @transform_7, window_bounds = array<i64: 512, 128>}, {pipeline_mode = #tpu.pipeline_mode<synchronous>, transform_indices = @transform_8, window_bounds = array<i64: 1, 128>}, {transform_indices = @transform_9, window_bounds = array<i64: 16, 128>}]} {
    %c0 = arith.constant 0 : index
    %c0_0 = arith.constant 0 : index
    %0 = vector.load %arg1[%c0, %c0_0] : memref<16x16xf32, #tpu.memory_space<vmem>>, vector<16x16xf32>
    %1 = arith.truncf %0 : vector<16x16xf32> to vector<16x16xbf16>
    %c0_1 = arith.constant 0 : index
    %c0_2 = arith.constant 0 : index
    %2 = vector.load %arg2[%c0_1, %c0_2] : memref<16x4xf32, #tpu.memory_space<vmem>>, vector<16x4xf32>
    %3 = arith.truncf %2 : vector<16x4xf32> to vector<16x4xbf16>
    %c0_3 = arith.constant 0 : index
    %c0_4 = arith.constant 0 : index
    %4 = vector.load %arg3[%c0_3, %c0_4] : memref<16x1024xbf16, #tpu.memory_space<vmem>>, vector<16x1024xbf16>
    %cst = arith.constant dense<0.000000e+00> : vector<16x1024xf32>
    %5 = tpu.matmul %1, %4, %cst {dimension_numbers = #tpu.dot_dimension_numbers<[1], [0], [0], [1], [0, 0, 1, 1], [], []>} : vector<16x16xbf16>, vector<16x1024xbf16>, vector<16x1024xf32> -> vector<16x1024xf32>
    %c0_5 = arith.constant 0 : index
    %c0_6 = arith.constant 0 : index
    %6 = vector.load %arg4[%c0_5, %c0_6] : memref<4x1024xbf16, #tpu.memory_space<vmem>>, vector<4x1024xbf16>
    %cst_7 = arith.constant dense<0.000000e+00> : vector<16x1024xf32>
    %7 = tpu.matmul %3, %6, %cst_7 {dimension_numbers = #tpu.dot_dimension_numbers<[1], [0], [0], [1], [0, 0, 1, 1], [], []>} : vector<16x4xbf16>, vector<4x1024xbf16>, vector<16x1024xf32> -> vector<16x1024xf32>
    %8 = arith.addf %5, %7 : vector<16x1024xf32>
    %c0_8 = arith.constant 0 : index
    %c0_9 = arith.constant 0 : index
    %9 = vector.load %arg5[%c0_8, %c0_9] : memref<1x1024xf32, #tpu.memory_space<vmem>>, vector<1x1024xf32>
    %10 = vector.broadcast %9 : vector<1x1024xf32> to vector<16x1024xf32>
    %11 = arith.addf %8, %10 : vector<16x1024xf32>
    %cst_10 = arith.constant 0.000000e+00 : f32
    %12 = vector.broadcast %cst_10 : f32 to vector<16x1024xf32>
    %13 = arith.maximumf %11, %12 : vector<16x1024xf32>
    %14 = arith.truncf %13 : vector<16x1024xf32> to vector<16x1024xbf16>
    %c0_11 = arith.constant 0 : index
    %c0_12 = arith.constant 0 : index
    %15 = vector.load %arg6[%c0_11, %c0_12] : memref<1024x512xbf16, #tpu.memory_space<vmem>>, vector<1024x512xbf16>
    %cst_13 = arith.constant dense<0.000000e+00> : vector<16x512xf32>
    %16 = tpu.matmul %14, %15, %cst_13 {dimension_numbers = #tpu.dot_dimension_numbers<[1], [0], [0], [1], [0, 0, 1, 1], [], []>} : vector<16x1024xbf16>, vector<1024x512xbf16>, vector<16x512xf32> -> vector<16x512xf32>
    %c0_14 = arith.constant 0 : index
    %c0_15 = arith.constant 0 : index
    %17 = vector.load %arg7[%c0_14, %c0_15] : memref<1x512xf32, #tpu.memory_space<vmem>>, vector<1x512xf32>
    %18 = vector.broadcast %17 : vector<1x512xf32> to vector<16x512xf32>
    %19 = arith.addf %16, %18 : vector<16x512xf32>
    %cst_16 = arith.constant 0.000000e+00 : f32
    %20 = vector.broadcast %cst_16 : f32 to vector<16x512xf32>
    %21 = arith.maximumf %19, %20 : vector<16x512xf32>
    %22 = arith.truncf %21 : vector<16x512xf32> to vector<16x512xbf16>
    %c0_17 = arith.constant 0 : index
    %c0_18 = arith.constant 0 : index
    %23 = vector.load %arg8[%c0_17, %c0_18] : memref<512x128xbf16, #tpu.memory_space<vmem>>, vector<512x128xbf16>
    %cst_19 = arith.constant dense<0.000000e+00> : vector<16x128xf32>
    %24 = tpu.matmul %22, %23, %cst_19 {dimension_numbers = #tpu.dot_dimension_numbers<[1], [0], [0], [1], [0, 0, 1, 1], [], []>} : vector<16x512xbf16>, vector<512x128xbf16>, vector<16x128xf32> -> vector<16x128xf32>
    %c0_20 = arith.constant 0 : index
    %c0_21 = arith.constant 0 : index
    %25 = vector.load %arg9[%c0_20, %c0_21] : memref<1x128xf32, #tpu.memory_space<vmem>>, vector<1x128xf32>
    %26 = vector.broadcast %25 : vector<1x128xf32> to vector<16x128xf32>
    %27 = arith.addf %24, %26 : vector<16x128xf32>
    %c0_22 = arith.constant 0 : index
    %c0_23 = arith.constant 0 : index
    %28 = vector.load %arg10[%c0_22, %c0_23] : memref<16x128xf32, #tpu.memory_space<vmem>>, vector<16x128xf32>
    tpu.vector_store %arg10[%c0_22, %c0_23], %27 {strides = array<i32>} : memref<16x128xf32, #tpu.memory_space<vmem>>, vector<16x128xf32>,
    return
  }
  func.func @transform_0(%arg0: i32) -> (i32, i32) {
    %c0_i32 = arith.constant 0 : i32
    %c0_i32_0 = arith.constant 0 : i32
    return %arg0, %c0_i32 : i32, i32
  }
  func.func @transform_1(%arg0: i32) -> (i32, i32) {
    %c0_i32 = arith.constant 0 : i32
    %c0_i32_0 = arith.constant 0 : i32
    return %arg0, %c0_i32 : i32, i32
  }
  func.func @transform_2(%arg0: i32) -> (i32, i32) {
    %c0_i32 = arith.constant 0 : i32
    %c0_i32_0 = arith.constant 0 : i32
    %c0_i32_1 = arith.constant 0 : i32
    return %c0_i32, %c0_i32_0 : i32, i32
  }
  func.func @transform_3(%arg0: i32) -> (i32, i32) {
    %c0_i32 = arith.constant 0 : i32
    %c0_i32_0 = arith.constant 0 : i32
    %c0_i32_1 = arith.constant 0 : i32
    return %c0_i32, %c0_i32_0 : i32, i32
  }
  func.func @transform_4(%arg0: i32) -> (i32, i32) {
    %c0_i32 = arith.constant 0 : i32
    %c0_i32_0 = arith.constant 0 : i32
    %c0_i32_1 = arith.constant 0 : i32
    return %c0_i32, %c0_i32_0 : i32, i32
  }
  func.func @transform_5(%arg0: i32) -> (i32, i32) {
    %c0_i32 = arith.constant 0 : i32
    %c0_i32_0 = arith.constant 0 : i32
    %c0_i32_1 = arith.constant 0 : i32
    return %c0_i32, %c0_i32_0 : i32, i32
  }
  func.func @transform_6(%arg0: i32) -> (i32, i32) {
    %c0_i32 = arith.constant 0 : i32
    %c0_i32_0 = arith.constant 0 : i32
    %c0_i32_1 = arith.constant 0 : i32
    return %c0_i32, %c0_i32_0 : i32, i32
  }
  func.func @transform_7(%arg0: i32) -> (i32, i32) {
    %c0_i32 = arith.constant 0 : i32
    %c0_i32_0 = arith.constant 0 : i32
    %c0_i32_1 = arith.constant 0 : i32
    return %c0_i32, %c0_i32_0 : i32, i32
  }
  func.func @transform_8(%arg0: i32) -> (i32, i32) {
    %c0_i32 = arith.constant 0 : i32
    %c0_i32_0 = arith.constant 0 : i32
    %c0_i32_1 = arith.constant 0 : i32
    return %c0_i32, %c0_i32_0 : i32, i32
  }
  func.func @transform_9(%arg0: i32) -> (i32, i32) {
    %c0_i32 = arith.constant 0 : i32
    %c0_i32_0 = arith.constant 0 : i32
    return %arg0, %c0_i32 : i32, i32
  }
}

</mosaic_0001>

<llo_original>
// kernel: tpu_custom_call.1
$region0: #{tpu_custom_call.1}
  #allocation0 [shape = 'u32[]', space=smem, size = 0x4, offset = 0x4, fixed_abs, tag = 'smem constant byte address 0x4 - core index']
  #allocation1 [shape = 'u32[72,128]{1,0:T(1,128)}', space=vmem, size = 0x9000, scoped, tag = 'internal scratch']
  %s0 = inlined_call_operand.vmem [shape: f32[16,16], index: 0, kind: input, shape index: {}]
  %s1 = inlined_call_operand.vmem [shape: f32[16,4], index: 1, kind: input, shape index: {}]
  %s2 = inlined_call_operand.hbm [shape: bf16[16,1024], index: 2, kind: input, shape index: {}]
  %s3 = inlined_call_operand.hbm [shape: bf16[4,1024], index: 3, kind: input, shape index: {}]
  %s4 = inlined_call_operand.hbm [shape: f32[1,1024], index: 4, kind: input, shape index: {}]
  %s5 = inlined_call_operand.hbm [shape: bf16[1024,512], index: 5, kind: input, shape index: {}]
  %s6 = inlined_call_operand.vmem [shape: f32[1,512], index: 6, kind: input, shape index: {}]
  %s7 = inlined_call_operand.hbm [shape: bf16[512,128], index: 7, kind: input, shape index: {}]
  %s8 = inlined_call_operand.vmem [shape: f32[1,128], index: 8, kind: input, shape index: {}]
  %s9 = inlined_call_operand.hbm [shape: f32[16,128], index: 9, kind: output, shape index: {}]
  %s10 = sld [smem:[#allocation0]]
  $region66: #{tpu_custom_call.1} parent=0
    _
  %s12 = ssub.s32 1, %s10
  %s13 = scalar_select 0, %s12, %s10
  $region1: #{tpu_custom_call.1} parent=0
    #allocation2 [shape = 'u8[32768]{0}', space=vmem, size = 0x8000, scoped, tag = 'input window, operand 2, single buffered']
    #allocation3 [shape = 's32[1]{0}', space=sflag, size = 0x4, scoped, tag = 'scoped memory for tpu_custom_call.1']
    #allocation4 [shape = 's32[1]{0}', space=sflag, size = 0x4, scoped, tag = 'scoped memory for tpu_custom_call.1']
    #allocation5 [shape = 'u8[8192]{0}', space=vmem, size = 0x2000, scoped, tag = 'input window, operand 3, single buffered']
    #allocation6 [shape = 's32[1]{0}', space=sflag, size = 0x4, scoped, tag = 'scoped memory for tpu_custom_call.1']
    #allocation7 [shape = 'u8[4096]{0}', space=vmem, size = 0x1000, scoped, tag = 'input window, operand 4, single buffered']
    #allocation8 [shape = 'u8[1048576]{0}', space=vmem, size = 0x100000, scoped, tag = 'input window, operand 5, single buffered']
    #allocation9 [shape = 's32[1]{0}', space=sflag, size = 0x4, scoped, tag = 'scoped memory for tpu_custom_call.1']
    #allocation10 [shape = 'u8[131072]{0}', space=vmem, size = 0x20000, scoped, tag = 'input window, operand 7, single buffered']
    #allocation11 [shape = 'u8[8192]{0}', space=vmem, size = 0x2000, scoped, tag = 'output window, operand 0, single buffered']
    %14 = vsyncpa [#allocation3], 0
    %15 = vsyncpa [#allocation6], 0
    %16 = vsyncpa [#allocation9], 0
    %17 = vsyncpa [#allocation4], 0
    // Predicated region
    $region2: #{tpu_custom_call.1} parent=1 // pred_check
      _
    $region3: #{tpu_custom_call.1} parent=1 // pred_check_branch
      %19 = sbr.rel (0) target = $region5
    $region4: #{tpu_custom_call.1} parent=1 // pred_region
      _
    $region5: #{tpu_custom_call.1} parent=1 // pred_fallthru
      _
    // Predicated region
    $region6: #{tpu_custom_call.1} parent=1 // pred_check
      _
    $region7: #{tpu_custom_call.1} parent=1 // pred_check_branch
      %21 = sbr.rel (0) target = $region9
    $region8: #{tpu_custom_call.1} parent=1 // pred_region
      _
    $region9: #{tpu_custom_call.1} parent=1 // pred_fallthru
      _
    // Predicated region
    $region10: #{tpu_custom_call.1} parent=1 // pred_check
      _
    $region11: #{tpu_custom_call.1} parent=1 // pred_check_branch
      %23 = sbr.rel (0) target = $region13
    $region12: #{tpu_custom_call.1} parent=1 // pred_region
      %25 = vsyncadd [#allocation3], 0
      %s26 = sshll.u32 %s2, 4
      %s27 = int_to_ptr.hbm [resolvable:$true] %s26
      %s28 = sshll.u32 [#allocation2], 4
      %s29 = int_to_ptr.vmem [resolvable:$true] %s28
      %34 = dma.hbm_to_vmem [thread:$0]  %s27, 1024, %s29, [#allocation3], 512, 512, 32
    $region13: #{tpu_custom_call.1} parent=1 // pred_fallthru
      _
    // Predicated region
    $region14: #{tpu_custom_call.1} parent=1 // pred_check
      _
    $region15: #{tpu_custom_call.1} parent=1 // pred_check_branch
      %36 = sbr.rel (0) target = $region17
    $region16: #{tpu_custom_call.1} parent=1 // pred_region
      %38 = vsyncadd [#allocation6], 0
      %s40 = sshll.u32 %s3, 4
      %s41 = int_to_ptr.hbm [resolvable:$true] %s40
      %s42 = sshll.u32 [#allocation5], 4
      %s43 = int_to_ptr.vmem [resolvable:$true] %s42
      %45 = dma.hbm_to_vmem [thread:$0]  %s41, 256, %s43, [#allocation6]
    $region17: #{tpu_custom_call.1} parent=1 // pred_fallthru
      _
    // Predicated region
    $region18: #{tpu_custom_call.1} parent=1 // pred_check
      _
    $region19: #{tpu_custom_call.1} parent=1 // pred_check_branch
      %47 = sbr.rel (0) target = $region21
    $region20: #{tpu_custom_call.1} parent=1 // pred_region
      %49 = vsyncadd [#allocation6], 0
      %s51 = sshll.u32 %s4, 4
      %s52 = int_to_ptr.hbm [resolvable:$true] %s51
      %s53 = sshll.u32 [#allocation7], 4
      %s54 = int_to_ptr.vmem [resolvable:$true] %s53
      %56 = dma.hbm_to_vmem [thread:$0]  %s52, 128, %s54, [#allocation6]
    $region21: #{tpu_custom_call.1} parent=1 // pred_fallthru
      _
    // Predicated region
    $region22: #{tpu_custom_call.1} parent=1 // pred_check
      _
    $region23: #{tpu_custom_call.1} parent=1 // pred_check_branch
      %58 = sbr.rel (0) target = $region25
    $region24: #{tpu_custom_call.1} parent=1 // pred_region
      %60 = vsyncadd [#allocation9], 0
      %s61 = sshll.u32 %s5, 4
      %s62 = int_to_ptr.hbm [resolvable:$true] %s61
      %s63 = sshll.u32 [#allocation8], 4
      %s64 = int_to_ptr.vmem [resolvable:$true] %s63
      %69 = dma.hbm_to_vmem [thread:$0]  %s62, 32768, %s64, [#allocation9], 256, 256, 16
    $region25: #{tpu_custom_call.1} parent=1 // pred_fallthru
      _
    // Predicated region
    $region26: #{tpu_custom_call.1} parent=1 // pred_check
      _
    $region27: #{tpu_custom_call.1} parent=1 // pred_check_branch
      %71 = sbr.rel (0) target = $region29
    $region28: #{tpu_custom_call.1} parent=1 // pred_region
      _
    $region29: #{tpu_custom_call.1} parent=1 // pred_fallthru
      _
    // Predicated region
    $region30: #{tpu_custom_call.1} parent=1 // pred_check
      _
    $region31: #{tpu_custom_call.1} parent=1 // pred_check_branch
      %73 = sbr.rel (0) target = $region33
    $region32: #{tpu_custom_call.1} parent=1 // pred_region
      %75 = vsyncadd [#allocation9], 0
      %s76 = sshll.u32 %s7, 4
      %s77 = int_to_ptr.hbm [resolvable:$true] %s76
      %s78 = sshll.u32 [#allocation10], 4
      %s79 = int_to_ptr.vmem [resolvable:$true] %s78
      %84 = dma.hbm_to_vmem [thread:$0]  %s77, 4096, %s79, [#allocation9], 64, 64, 4
    $region33: #{tpu_custom_call.1} parent=1 // pred_fallthru
      _
    // Predicated region
    $region34: #{tpu_custom_call.1} parent=1 // pred_check
      _
    $region35: #{tpu_custom_call.1} parent=1 // pred_check_branch
      %86 = sbr.rel (0) target = $region37
    $region36: #{tpu_custom_call.1} parent=1 // pred_region
      _
    $region37: #{tpu_custom_call.1} parent=1 // pred_fallthru
      _
    // Predicated region
    $region38: #{tpu_custom_call.1} parent=1 // pred_check
      _
    $region39: #{tpu_custom_call.1} parent=1 // pred_check_branch
      %88 = sbr.rel (0) target = $region41
    $region40: #{tpu_custom_call.1} parent=1 // pred_region
      %90 = dma.done [#allocation3], 1024
    $region41: #{tpu_custom_call.1} parent=1 // pred_fallthru
      _
    // Predicated region
    $region42: #{tpu_custom_call.1} parent=1 // pred_check
      _
    $region43: #{tpu_custom_call.1} parent=1 // pred_check_branch
      %92 = sbr.rel (0) target = $region45
    $region44: #{tpu_custom_call.1} parent=1 // pred_region
      %94 = dma.done [#allocation6], 256
    $region45: #{tpu_custom_call.1} parent=1 // pred_fallthru
      _
    // Predicated region
    $region46: #{tpu_custom_call.1} parent=1 // pred_check
      _
    $region47: #{tpu_custom_call.1} parent=1 // pred_check_branch
      %96 = sbr.rel (0) target = $region49
    $region48: #{tpu_custom_call.1} parent=1 // pred_region
      %98 = dma.done [#allocation6], 128
    $region49: #{tpu_custom_call.1} parent=1 // pred_fallthru
      _
    // Predicated region
    $region50: #{tpu_custom_call.1} parent=1 // pred_check
      _
    $region51: #{tpu_custom_call.1} parent=1 // pred_check_branch
      %100 = sbr.rel (0) target = $region53
    $region52: #{tpu_custom_call.1} parent=1 // pred_region
      %102 = dma.done [#allocation9], 32768
    $region53: #{tpu_custom_call.1} parent=1 // pred_fallthru
      _
    // Predicated region
    $region54: #{tpu_custom_call.1} parent=1 // pred_check
      _
    $region55: #{tpu_custom_call.1} parent=1 // pred_check_branch
      %104 = sbr.rel (0) target = $region57
    $region56: #{tpu_custom_call.1} parent=1 // pred_region
      %106 = dma.done [#allocation9], 4096
    $region57: #{tpu_custom_call.1} parent=1 // pred_fallthru
      _
    %v108 = vld [vmem:[%s0] sm:$0xff]
    %v109 = vld [vmem:[%s0 + $0x8] sm:$0xff]
    %v110 = vpack.c.bf16 %v109, %v108
    %v111 = vld [vmem:[%s1] sm:$0xff]
    %v112 = vld [vmem:[%s1 + $0x8] sm:$0xff]
    %v113 = vpack.c.bf16 %v112, %v111
    %v114 = vld [vmem:[#allocation2] sm:$0xff]
    %v115 = vld [vmem:[#allocation2 + $0x8] sm:$0xff]
    %v116 = vld [vmem:[#allocation2 + $0x10] sm:$0xff]
    %v117 = vld [vmem:[#allocation2 + $0x18] sm:$0xff]
    %v118 = vld [vmem:[#allocation2 + $0x20] sm:$0xff]
    %v119 = vld [vmem:[#allocation2 + $0x28] sm:$0xff]
    %v120 = vld [vmem:[#allocation2 + $0x30] sm:$0xff]
    %v121 = vld [vmem:[#allocation2 + $0x38] sm:$0xff]
    %v122 = vld [vmem:[#allocation5] sm:$0xff]
    %v123 = vld [vmem:[#allocation5 + $0x8] sm:$0xff]
    %125 = vst [vmem:[#allocation1] ss:$4 sm:$0xff] %v122
    %s127 = scalar_lea.vmem [#allocation1], 32
    %128 = vst [vmem:[%s127] ss:$4 sm:$0xff] %v123
    %v129 = vld.sshfl [vmem:[#allocation1] sm:$0xff pattern:$0x73625140]
    %v130 = vld.sshfl [vmem:[#allocation1 + $0x8] sm:$0xff pattern:$0x73625140]
    %v131 = vld.sshfl [vmem:[#allocation1 + $0x10] sm:$0xff pattern:$0x73625140]
    %v132 = vld.sshfl [vmem:[#allocation1 + $0x18] sm:$0xff pattern:$0x73625140]
    %v133 = vld.sshfl [vmem:[#allocation1 + $0x20] sm:$0xff pattern:$0x73625140]
    %v134 = vld.sshfl [vmem:[#allocation1 + $0x28] sm:$0xff pattern:$0x73625140]
    %v135 = vld.sshfl [vmem:[#allocation1 + $0x30] sm:$0xff pattern:$0x73625140]
    %v136 = vld.sshfl [vmem:[#allocation1 + $0x38] sm:$0xff pattern:$0x73625140]
    %vm137 = vcmask 31744
    %v139 = vsel %vm137, %v113, 0
    %vm141 = vcmask 1041408
    %v142 = vsel %vm141, %v129, 0
    %v144 = vsel %vm141, %v130, 0
    %v146 = vsel %vm141, %v131, 0
    %v148 = vsel %vm141, %v132, 0
    %v150 = vsel %vm141, %v133, 0
    %v152 = vsel %vm141, %v134, 0
    %v154 = vsel %vm141, %v135, 0
    %v156 = vsel %vm141, %v136, 0
    %158 = vmatpush.bf16.msra.mxu0 0
    %159 = vmatpush.bf16.msra.mxu0 0
    %160 = vmatpush.bf16.msra.mxu0 0
    %161 = vmatpush.bf16.msra.mxu0 0
    %162 = vmatpush.bf16.msra.mxu0 0
    %163 = vmatpush.bf16.msra.mxu0 0
    %164 = vmatpush.bf16.msra.mxu0 0
    %165 = vmatpush.bf16.msra.mxu0 %v142
    %166 = vmatmul.bf16.gmra.mxu0 %v139
    %v167 = vpop.f32.mrf.mxu0
    %v168 = vadd.f32 0.0, %v167
    %v169 = vpop.f32.mrf.mxu0
    %v170 = vadd.f32 0.0, %v169
    %171 = vdwg.mxu0
    %172 = vmatpush.bf16.msra.mxu0 0
    %173 = vmatpush.bf16.msra.mxu0 0
    %174 = vmatpush.bf16.msra.mxu0 0
    %175 = vmatpush.bf16.msra.mxu0 0
    %176 = vmatpush.bf16.msra.mxu0 0
    %177 = vmatpush.bf16.msra.mxu0 0
    %178 = vmatpush.bf16.msra.mxu0 0
    %179 = vmatpush.bf16.msra.mxu0 %v144
    %180 = vmatmul.bf16.gmra.mxu0 %v139
    %v181 = vpop.f32.mrf.mxu0
    %v182 = vadd.f32 0.0, %v181
    %v183 = vpop.f32.mrf.mxu0
    %v184 = vadd.f32 0.0, %v183
    %185 = vdwg.mxu0
    %186 = vmatpush.bf16.msra.mxu0 0
    %187 = vmatpush.bf16.msra.mxu0 0
    %188 = vmatpush.bf16.msra.mxu0 0
    %189 = vmatpush.bf16.msra.mxu0 0
    %190 = vmatpush.bf16.msra.mxu0 0
    %191 = vmatpush.bf16.msra.mxu0 0
    %192 = vmatpush.bf16.msra.mxu0 0
    %193 = vmatpush.bf16.msra.mxu0 %v146
    %194 = vmatmul.bf16.gmra.mxu0 %v139
    %v195 = vpop.f32.mrf.mxu0
    %v196 = vadd.f32 0.0, %v195
    %v197 = vpop.f32.mrf.mxu0
    %v198 = vadd.f32 0.0, %v197
    %199 = vdwg.mxu0
    %200 = vmatpush.bf16.msra.mxu0 0
    %201 = vmatpush.bf16.msra.mxu0 0
    %202 = vmatpush.bf16.msra.mxu0 0
    %203 = vmatpush.bf16.msra.mxu0 0
    %204 = vmatpush.bf16.msra.mxu0 0
    %205 = vmatpush.bf16.msra.mxu0 0
    %206 = vmatpush.bf16.msra.mxu0 0
    %207 = vmatpush.bf16.msra.mxu0 %v148
    %208 = vmatmul.bf16.gmra.mxu0 %v139
    %v209 = vpop.f32.mrf.mxu0
    %v210 = vadd.f32 0.0, %v209
    %v211 = vpop.f32.mrf.mxu0
    %v212 = vadd.f32 0.0, %v211
    %213 = vdwg.mxu0
    %214 = vmatpush.bf16.msra.mxu0 0
    %215 = vmatpush.bf16.msra.mxu0 0
    %216 = vmatpush.bf16.msra.mxu0 0
    %217 = vmatpush.bf16.msra.mxu0 0
    %218 = vmatpush.bf16.msra.mxu0 0
    %219 = vmatpush.bf16.msra.mxu0 0
    %220 = vmatpush.bf16.msra.mxu0 0
    %221 = vmatpush.bf16.msra.mxu0 %v150
    %222 = vmatmul.bf16.gmra.mxu0 %v139
    %v223 = vpop.f32.mrf.mxu0
    %v224 = vadd.f32 0.0, %v223
    %v225 = vpop.f32.mrf.mxu0
    %v226 = vadd.f32 0.0, %v225
    %227 = vdwg.mxu0
    %228 = vmatpush.bf16.msra.mxu0 0
    %229 = vmatpush.bf16.msra.mxu0 0
    %230 = vmatpush.bf16.msra.mxu0 0
    %231 = vmatpush.bf16.msra.mxu0 0
    %232 = vmatpush.bf16.msra.mxu0 0
    %233 = vmatpush.bf16.msra.mxu0 0
    %234 = vmatpush.bf16.msra.mxu0 0
    %235 = vmatpush.bf16.msra.mxu0 %v152
    %236 = vmatmul.bf16.gmra.mxu0 %v139
    %v237 = vpop.f32.mrf.mxu0
    %v238 = vadd.f32 0.0, %v237
    %v239 = vpop.f32.mrf.mxu0
    %v240 = vadd.f32 0.0, %v239
    %241 = vdwg.mxu0
    %242 = vmatpush.bf16.msra.mxu0 0
    %243 = vmatpush.bf16.msra.mxu0 0
    %244 = vmatpush.bf16.msra.mxu0 0
    %245 = vmatpush.bf16.msra.mxu0 0
    %246 = vmatpush.bf16.msra.mxu0 0
    %247 = vmatpush.bf16.msra.mxu0 0
    %248 = vmatpush.bf16.msra.mxu0 0
    %249 = vmatpush.bf16.msra.mxu0 %v154
    %250 = vmatmul.bf16.gmra.mxu0 %v139
    %v251 = vpop.f32.mrf.mxu0
    %v252 = vadd.f32 0.0, %v251
    %v253 = vpop.f32.mrf.mxu0
    %v254 = vadd.f32 0.0, %v253
    %255 = vdwg.mxu0
    %256 = vmatpush.bf16.msra.mxu0 0
    %257 = vmatpush.bf16.msra.mxu0 0
    %258 = vmatpush.bf16.msra.mxu0 0
    %259 = vmatpush.bf16.msra.mxu0 0
    %260 = vmatpush.bf16.msra.mxu0 0
    %261 = vmatpush.bf16.msra.mxu0 0
    %262 = vmatpush.bf16.msra.mxu0 0
    %263 = vmatpush.bf16.msra.mxu0 %v156
    %264 = vmatmul.bf16.gmra.mxu0 %v139
    %v265 = vpop.f32.mrf.mxu0
    %v266 = vadd.f32 0.0, %v265
    %v267 = vpop.f32.mrf.mxu0
    %v268 = vadd.f32 0.0, %v267
    %269 = vdwg.mxu0
    %v278 = vunpack.c.l.b16 %v114
    %v279 = vunpack.c.h.b16 %v114
    %v280 = vunpack.c.l.b16 %v115
    %v281 = vunpack.c.h.b16 %v115
    %v282 = vunpack.c.l.b16 %v116
    %v283 = vunpack.c.h.b16 %v116
    %v284 = vunpack.c.l.b16 %v117
    %v285 = vunpack.c.h.b16 %v117
    %v286 = vunpack.c.l.b16 %v118
    %v287 = vunpack.c.h.b16 %v118
    %v288 = vunpack.c.l.b16 %v119
    %v289 = vunpack.c.h.b16 %v119
    %v290 = vunpack.c.l.b16 %v120
    %v291 = vunpack.c.h.b16 %v120
    %v292 = vunpack.c.l.b16 %v121
    %v293 = vunpack.c.h.b16 %v121
    %v294 = vpack.c.b16 %v286, %v278
    %v295 = vpack.c.b16 %v287, %v279
    %v296 = vpack.c.b16 %v288, %v280
    %v297 = vpack.c.b16 %v289, %v281
    %v298 = vpack.c.b16 %v290, %v282
    %v299 = vpack.c.b16 %v291, %v283
    %v300 = vpack.c.b16 %v292, %v284
    %v301 = vpack.c.b16 %v293, %v285
    %vm310 = vcmask 130048
    %v312 = vsel %vm310, %v110, 0
    %314 = vmatpush.bf16.msra.mxu0 0
    %315 = vmatpush.bf16.msra.mxu0 0
    %316 = vmatpush.bf16.msra.mxu0 0
    %317 = vmatpush.bf16.msra.mxu0 0
    %318 = vmatpush.bf16.msra.mxu0 0
    %319 = vmatpush.bf16.msra.mxu0 0
    %320 = vmatpush.bf16.msra.mxu0 0
    %321 = vmatpush.bf16.msra.mxu0 %v294
    %322 = vmatmul.bf16.gmra.mxu0 %v312
    %v323 = vpop.f32.mrf.mxu0
    %v324 = vadd.f32 %v168, %v323
    %v325 = vpop.f32.mrf.mxu0
    %v326 = vadd.f32 %v170, %v325
    %327 = vdwg.mxu0
    %328 = vmatpush.bf16.msra.mxu0 0
    %329 = vmatpush.bf16.msra.mxu0 0
    %330 = vmatpush.bf16.msra.mxu0 0
    %331 = vmatpush.bf16.msra.mxu0 0
    %332 = vmatpush.bf16.msra.mxu0 0
    %333 = vmatpush.bf16.msra.mxu0 0
    %334 = vmatpush.bf16.msra.mxu0 0
    %335 = vmatpush.bf16.msra.mxu0 %v295
    %336 = vmatmul.bf16.gmra.mxu0 %v312
    %v337 = vpop.f32.mrf.mxu0
    %v338 = vadd.f32 %v182, %v337
    %v339 = vpop.f32.mrf.mxu0
    %v340 = vadd.f32 %v184, %v339
    %341 = vdwg.mxu0
    %342 = vmatpush.bf16.msra.mxu0 0
    %343 = vmatpush.bf16.msra.mxu0 0
    %344 = vmatpush.bf16.msra.mxu0 0
    %345 = vmatpush.bf16.msra.mxu0 0
    %346 = vmatpush.bf16.msra.mxu0 0
    %347 = vmatpush.bf16.msra.mxu0 0
    %348 = vmatpush.bf16.msra.mxu0 0
    %349 = vmatpush.bf16.msra.mxu0 %v296
    %350 = vmatmul.bf16.gmra.mxu0 %v312
    %v351 = vpop.f32.mrf.mxu0
    %v352 = vadd.f32 %v196, %v351
    %v353 = vpop.f32.mrf.mxu0
    %v354 = vadd.f32 %v198, %v353
    %355 = vdwg.mxu0
    %356 = vmatpush.bf16.msra.mxu0 0
    %357 = vmatpush.bf16.msra.mxu0 0
    %358 = vmatpush.bf16.msra.mxu0 0
    %359 = vmatpush.bf16.msra.mxu0 0
    %360 = vmatpush.bf16.msra.mxu0 0
    %361 = vmatpush.bf16.msra.mxu0 0
    %362 = vmatpush.bf16.msra.mxu0 0
    %363 = vmatpush.bf16.msra.mxu0 %v297
    %364 = vmatmul.bf16.gmra.mxu0 %v312
    %v365 = vpop.f32.mrf.mxu0
    %v366 = vadd.f32 %v210, %v365
    %v367 = vpop.f32.mrf.mxu0
    %v368 = vadd.f32 %v212, %v367
    %369 = vdwg.mxu0
    %370 = vmatpush.bf16.msra.mxu0 0
    %371 = vmatpush.bf16.msra.mxu0 0
    %372 = vmatpush.bf16.msra.mxu0 0
    %373 = vmatpush.bf16.msra.mxu0 0
    %374 = vmatpush.bf16.msra.mxu0 0
    %375 = vmatpush.bf16.msra.mxu0 0
    %376 = vmatpush.bf16.msra.mxu0 0
    %377 = vmatpush.bf16.msra.mxu0 %v298
    %378 = vmatmul.bf16.gmra.mxu0 %v312
    %v379 = vpop.f32.mrf.mxu0
    %v380 = vadd.f32 %v224, %v379
    %v381 = vpop.f32.mrf.mxu0
    %v382 = vadd.f32 %v226, %v381
    %383 = vdwg.mxu0
    %384 = vmatpush.bf16.msra.mxu0 0
    %385 = vmatpush.bf16.msra.mxu0 0
    %386 = vmatpush.bf16.msra.mxu0 0
    %387 = vmatpush.bf16.msra.mxu0 0
    %388 = vmatpush.bf16.msra.mxu0 0
    %389 = vmatpush.bf16.msra.mxu0 0
    %390 = vmatpush.bf16.msra.mxu0 0
    %391 = vmatpush.bf16.msra.mxu0 %v299
    %392 = vmatmul.bf16.gmra.mxu0 %v312
    %v393 = vpop.f32.mrf.mxu0
    %v394 = vadd.f32 %v238, %v393
    %v395 = vpop.f32.mrf.mxu0
    %v396 = vadd.f32 %v240, %v395
    %397 = vdwg.mxu0
    %398 = vmatpush.bf16.msra.mxu0 0
    %399 = vmatpush.bf16.msra.mxu0 0
    %400 = vmatpush.bf16.msra.mxu0 0
    %401 = vmatpush.bf16.msra.mxu0 0
    %402 = vmatpush.bf16.msra.mxu0 0
    %403 = vmatpush.bf16.msra.mxu0 0
    %404 = vmatpush.bf16.msra.mxu0 0
    %405 = vmatpush.bf16.msra.mxu0 %v300
    %406 = vmatmul.bf16.gmra.mxu0 %v312
    %v407 = vpop.f32.mrf.mxu0
    %v408 = vadd.f32 %v252, %v407
    %v409 = vpop.f32.mrf.mxu0
    %v410 = vadd.f32 %v254, %v409
    %411 = vdwg.mxu0
    %412 = vmatpush.bf16.msra.mxu0 0
    %413 = vmatpush.bf16.msra.mxu0 0
    %414 = vmatpush.bf16.msra.mxu0 0
    %415 = vmatpush.bf16.msra.mxu0 0
    %416 = vmatpush.bf16.msra.mxu0 0
    %417 = vmatpush.bf16.msra.mxu0 0
    %418 = vmatpush.bf16.msra.mxu0 0
    %419 = vmatpush.bf16.msra.mxu0 %v301
    %420 = vmatmul.bf16.gmra.mxu0 %v312
    %v421 = vpop.f32.mrf.mxu0
    %v422 = vadd.f32 %v266, %v421
    %v423 = vpop.f32.mrf.mxu0
    %v424 = vadd.f32 %v268, %v423
    %425 = vdwg.mxu0
    %v426 = vld [vmem:[#allocation7] sm:$0xff]
    %v428 = vperm.slane %v426, 0
    %v429 = vperm.slane %v426, 1
    %v430 = vperm.slane %v426, 2
    %v431 = vperm.slane %v426, 3
    %v432 = vperm.slane %v426, 4
    %v433 = vperm.slane %v426, 5
    %v434 = vperm.slane %v426, 6
    %v435 = vperm.slane %v426, 7
    %v444 = vadd.f32 %v324, %v428
    %v445 = vadd.f32 %v338, %v429
    %v446 = vadd.f32 %v352, %v430
    %v447 = vadd.f32 %v366, %v431
    %v448 = vadd.f32 %v380, %v432
    %v449 = vadd.f32 %v394, %v433
    %v450 = vadd.f32 %v408, %v434
    %v451 = vadd.f32 %v422, %v435
    %v452 = vadd.f32 %v326, %v428
    %v453 = vadd.f32 %v340, %v429
    %v454 = vadd.f32 %v354, %v430
    %v455 = vadd.f32 %v368, %v431
    %v456 = vadd.f32 %v382, %v432
    %v457 = vadd.f32 %v396, %v433
    %v458 = vadd.f32 %v410, %v434
    %v459 = vadd.f32 %v424, %v435
    %v460 = vmax.f32 %v444, 0.0
    %v461 = vmax.f32 %v445, 0.0
    %v462 = vmax.f32 %v446, 0.0
    %v463 = vmax.f32 %v447, 0.0
    %v464 = vmax.f32 %v448, 0.0
    %v465 = vmax.f32 %v449, 0.0
    %v466 = vmax.f32 %v450, 0.0
    %v467 = vmax.f32 %v451, 0.0
    %v468 = vmax.f32 %v452, 0.0
    %v469 = vmax.f32 %v453, 0.0
    %v470 = vmax.f32 %v454, 0.0
    %v471 = vmax.f32 %v455, 0.0
    %v472 = vmax.f32 %v456, 0.0
    %v473 = vmax.f32 %v457, 0.0
    %v474 = vmax.f32 %v458, 0.0
    %v475 = vmax.f32 %v459, 0.0
    %v476 = vpack.c.bf16 %v468, %v460
    %v477 = vpack.c.bf16 %v469, %v461
    %v478 = vpack.c.bf16 %v470, %v462
    %v479 = vpack.c.bf16 %v471, %v463
    %v480 = vpack.c.bf16 %v472, %v464
    %v481 = vpack.c.bf16 %v473, %v465
    %v482 = vpack.c.bf16 %v474, %v466
    %v483 = vpack.c.bf16 %v475, %v467
    %v484 = vld [vmem:[#allocation8] sm:$0xff]
    %v485 = vld [vmem:[#allocation8 + $0x8] sm:$0xff]
    %v486 = vld [vmem:[#allocation8 + $0x10] sm:$0xff]
    %v487 = vld [vmem:[#allocation8 + $0x18] sm:$0xff]
    %v488 = vld [vmem:[#allocation8 + $0x20] sm:$0xff]
    %v489 = vld [vmem:[#allocation8 + $0x28] sm:$0xff]
    %v490 = vld [vmem:[#allocation8 + $0x30] sm:$0xff]
    %v491 = vld [vmem:[#allocation8 + $0x38] sm:$0xff]
    %v492 = vld [vmem:[#allocation8 + $0x40] sm:$0xff]
    %v493 = vld [vmem:[#allocation8 + $0x48] sm:$0xff]
    %v494 = vld [vmem:[#allocation8 + $0x50] sm:$0xff]
    %v495 = vld [vmem:[#allocation8 + $0x58] sm:$0xff]
    %v496 = vld [vmem:[#allocation8 + $0x60] sm:$0xff]
    %v497 = vld [vmem:[#allocation8 + $0x68] sm:$0xff]
    %v498 = vld [vmem:[#allocation8 + $0x70] sm:$0xff]
    %v499 = vld [vmem:[#allocation8 + $0x78] sm:$0xff]
    %v500 = vld [vmem:[#allocation8 + $0x80] sm:$0xff]
    %v501 = vld [vmem:[#allocation8 + $0x88] sm:$0xff]
    %v502 = vld [vmem:[#allocation8 + $0x90] sm:$0xff]
    %v503 = vld [vmem:[#allocation8 + $0x98] sm:$0xff]
    %v504 = vld [vmem:[#allocation8 + $0xa0] sm:$0xff]
    %v505 = vld [vmem:[#allocation8 + $0xa8] sm:$0xff]
    %v506 = vld [vmem:[#allocation8 + $0xb0] sm:$0xff]
    %v507 = vld [vmem:[#allocation8 + $0xb8] sm:$0xff]
    %v508 = vld [vmem:[#allocation8 + $0xc0] sm:$0xff]
    %v509 = vld [vmem:[#allocation8 + $0xc8] sm:$0xff]
    %v510 = vld [vmem:[#allocation8 + $0xd0] sm:$0xff]
    %v511 = vld [vmem:[#allocation8 + $0xd8] sm:$0xff]
    %v512 = vld [vmem:[#allocation8 + $0xe0] sm:$0xff]
    %v513 = vld [vmem:[#allocation8 + $0xe8] sm:$0xff]
    %v514 = vld [vmem:[#allocation8 + $0xf0] sm:$0xff]
    %v515 = vld [vmem:[#allocation8 + $0xf8] sm:$0xff]
    %v516 = vld [vmem:[#allocation8 + $0x100] sm:$0xff]
    %v517 = vld [vmem:[#allocation8 + $0x108] sm:$0xff]
    %v518 = vld [vmem:[#allocation8 + $0x110] sm:$0xff]
    %v519 = vld [vmem:[#allocation8 + $0x118] sm:$0xff]
    %v520 = vld [vmem:[#allocation8 + $0x120] sm:$0xff]
    %v521 = vld [vmem:[#allocation8 + $0x128] sm:$0xff]
    %v522 = vld [vmem:[#allocation8 + $0x130] sm:$0xff]
    %v523 = vld [vmem:[#allocation8 + $0x138] sm:$0xff]
    %v524 = vld [vmem:[#allocation8 + $0x140] sm:$0xff]
    %v525 = vld [vmem:[#allocation8 + $0x148] sm:$0xff]
    %v526 = vld [vmem:[#allocation8 + $0x150] sm:$0xff]
    %v527 = vld [vmem:[#allocation8 + $0x158] sm:$0xff]
    %v528 = vld [vmem:[#allocation8 + $0x160] sm:$0xff]
    %v529 = vld [vmem:[#allocation8 + $0x168] sm:$0xff]
    %v530 = vld [vmem:[#allocation8 + $0x170] sm:$0xff]
    %v531 = vld [vmem:[#allocation8 + $0x178] sm:$0xff]
    %v532 = vld [vmem:[#allocation8 + $0x180] sm:$0xff]
    %v533 = vld [vmem:[#allocation8 + $0x188] sm:$0xff]
    %v534 = vld [vmem:[#allocation8 + $0x190] sm:$0xff]
    %v535 = vld [vmem:[#allocation8 + $0x198] sm:$0xff]
    %v536 = vld [vmem:[#allocation8 + $0x1a0] sm:$0xff]
    %v537 = vld [vmem:[#allocation8 + $0x1a8] sm:$0xff]
    %v538 = vld [vmem:[#allocation8 + $0x1b0] sm:$0xff]
    %v539 = vld [vmem:[#allocation8 + $0x1b8] sm:$0xff]
    %v540 = vld [vmem:[#allocation8 + $0x1c0] sm:$0xff]
    %v541 = vld [vmem:[#allocation8 + $0x1c8] sm:$0xff]
    %v542 = vld [vmem:[#allocation8 + $0x1d0] sm:$0xff]
    %v543 = vld [vmem:[#allocation8 + $0x1d8] sm:$0xff]
    %v544 = vld [vmem:[#allocation8 + $0x1e0] sm:$0xff]
    %v545 = vld [vmem:[#allocation8 + $0x1e8] sm:$0xff]
    %v546 = vld [vmem:[#allocation8 + $0x1f0] sm:$0xff]
    %v547 = vld [vmem:[#allocation8 + $0x1f8] sm:$0xff]
    %v548 = vld [vmem:[#allocation8 + $0x200] sm:$0xff]
    %v549 = vld [vmem:[#allocation8 + $0x208] sm:$0xff]
    %v550 = vld [vmem:[#allocation8 + $0x210] sm:$0xff]
    %v551 = vld [vmem:[#allocation8 + $0x218] sm:$0xff]
    %v552 = vld [vmem:[#allocation8 + $0x220] sm:$0xff]
    %v553 = vld [vmem:[#allocation8 + $0x228] sm:$0xff]
    %v554 = vld [vmem:[#allocation8 + $0x230] sm:$0xff]
    %v555 = vld [vmem:[#allocation8 + $0x238] sm:$0xff]
    %v556 = vld [vmem:[#allocation8 + $0x240] sm:$0xff]
    %v557 = vld [vmem:[#allocation8 + $0x248] sm:$0xff]
    %v558 = vld [vmem:[#allocation8 + $0x250] sm:$0xff]
    %v559 = vld [vmem:[#allocation8 + $0x258] sm:$0xff]
    %v560 = vld [vmem:[#allocation8 + $0x260] sm:$0xff]
    %v561 = vld [vmem:[#allocation8 + $0x268] sm:$0xff]
    %v562 = vld [vmem:[#allocation8 + $0x270] sm:$0xff]
    %v563 = vld [vmem:[#allocation8 + $0x278] sm:$0xff]
    %v564 = vld [vmem:[#allocation8 + $0x280] sm:$0xff]
    %v565 = vld [vmem:[#allocation8 + $0x288] sm:$0xff]
    %v566 = vld [vmem:[#allocation8 + $0x290] sm:$0xff]
    %v567 = vld [vmem:[#allocation8 + $0x298] sm:$0xff]
    %v568 = vld [vmem:[#allocation8 + $0x2a0] sm:$0xff]
    %v569 = vld [vmem:[#allocation8 + $0x2a8] sm:$0xff]
    %v570 = vld [vmem:[#allocation8 + $0x2b0] sm:$0xff]
    %v571 = vld [vmem:[#allocation8 + $0x2b8] sm:$0xff]
    %v572 = vld [vmem:[#allocation8 + $0x2c0] sm:$0xff]
    %v573 = vld [vmem:[#allocation8 + $0x2c8] sm:$0xff]
    %v574 = vld [vmem:[#allocation8 + $0x2d0] sm:$0xff]
    %v575 = vld [vmem:[#allocation8 + $0x2d8] sm:$0xff]
    %v576 = vld [vmem:[#allocation8 + $0x2e0] sm:$0xff]
    %v577 = vld [vmem:[#allocation8 + $0x2e8] sm:$0xff]
    %v578 = vld [vmem:[#allocation8 + $0x2f0] sm:$0xff]
    %v579 = vld [vmem:[#allocation8 + $0x2f8] sm:$0xff]
    %v580 = vld [vmem:[#allocation8 + $0x300] sm:$0xff]
    %v581 = vld [vmem:[#allocation8 + $0x308] sm:$0xff]
    %v582 = vld [vmem:[#allocation8 + $0x310] sm:$0xff]
    %v583 = vld [vmem:[#allocation8 + $0x318] sm:$0xff]
    %v584 = vld [vmem:[#allocation8 + $0x320] sm:$0xff]
    %v585 = vld [vmem:[#allocation8 + $0x328] sm:$0xff]
    %v586 = vld [vmem:[#allocation8 + $0x330] sm:$0xff]
    %v587 = vld [vmem:[#allocation8 + $0x338] sm:$0xff]
    %v588 = vld [vmem:[#allocation8 + $0x340] sm:$0xff]
    %v589 = vld [vmem:[#allocation8 + $0x348] sm:$0xff]
    %v590 = vld [vmem:[#allocation8 + $0x350] sm:$0xff]
    %v591 = vld [vmem:[#allocation8 + $0x358] sm:$0xff]
    %v592 = vld [vmem:[#allocation8 + $0x360] sm:$0xff]
    %v593 = vld [vmem:[#allocation8 + $0x368] sm:$0xff]
    %v594 = vld [vmem:[#allocation8 + $0x370] sm:$0xff]
    %v595 = vld [vmem:[#allocation8 + $0x378] sm:$0xff]
    %v596 = vld [vmem:[#allocation8 + $0x380] sm:$0xff]
    %v597 = vld [vmem:[#allocation8 + $0x388] sm:$0xff]
    %v598 = vld [vmem:[#allocation8 + $0x390] sm:$0xff]
    %v599 = vld [vmem:[#allocation8 + $0x398] sm:$0xff]
    %v600 = vld [vmem:[#allocation8 + $0x3a0] sm:$0xff]
    %v601 = vld [vmem:[#allocation8 + $0x3a8] sm:$0xff]
    %v602 = vld [vmem:[#allocation8 + $0x3b0] sm:$0xff]
    %v603 = vld [vmem:[#allocation8 + $0x3b8] sm:$0xff]
    %v604 = vld [vmem:[#allocation8 + $0x3c0] sm:$0xff]
    %v605 = vld [vmem:[#allocation8 + $0x3c8] sm:$0xff]
    %v606 = vld [vmem:[#allocation8 + $0x3d0] sm:$0xff]
    %v607 = vld [vmem:[#allocation8 + $0x3d8] sm:$0xff]
    %v608 = vld [vmem:[#allocation8 + $0x3e0] sm:$0xff]
    %v609 = vld [vmem:[#allocation8 + $0x3e8] sm:$0xff]
    %v610 = vld [vmem:[#allocation8 + $0x3f0] sm:$0xff]
    %v611 = vld [vmem:[#allocation8 + $0x3f8] sm:$0xff]
    %v612 = vld [vmem:[#allocation8 + $0x400] sm:$0xff]
    %v613 = vld [vmem:[#allocation8 + $0x408] sm:$0xff]
    %v614 = vld [vmem:[#allocation8 + $0x410] sm:$0xff]
    %v615 = vld [vmem:[#allocation8 + $0x418] sm:$0xff]
    %v616 = vld [vmem:[#allocation8 + $0x420] sm:$0xff]
    %v617 = vld [vmem:[#allocation8 + $0x428] sm:$0xff]
    %v618 = vld [vmem:[#allocation8 + $0x430] sm:$0xff]
    %v619 = vld [vmem:[#allocation8 + $0x438] sm:$0xff]
    %v620 = vld [vmem:[#allocation8 + $0x440] sm:$0xff]
    %v621 = vld [vmem:[#allocation8 + $0x448] sm:$0xff]
    %v622 = vld [vmem:[#allocation8 + $0x450] sm:$0xff]
    %v623 = vld [vmem:[#allocation8 + $0x458] sm:$0xff]
    %v624 = vld [vmem:[#allocation8 + $0x460] sm:$0xff]
    %v625 = vld [vmem:[#allocation8 + $0x468] sm:$0xff]
    %v626 = vld [vmem:[#allocation8 + $0x470] sm:$0xff]
    %v627 = vld [vmem:[#allocation8 + $0x478] sm:$0xff]
    %v628 = vld [vmem:[#allocation8 + $0x480] sm:$0xff]
    %v629 = vld [vmem:[#allocation8 + $0x488] sm:$0xff]
    %v630 = vld [vmem:[#allocation8 + $0x490] sm:$0xff]
    %v631 = vld [vmem:[#allocation8 + $0x498] sm:$0xff]
    %v632 = vld [vmem:[#allocation8 + $0x4a0] sm:$0xff]
    %v633 = vld [vmem:[#allocation8 + $0x4a8] sm:$0xff]
    %v634 = vld [vmem:[#allocation8 + $0x4b0] sm:$0xff]
    %v635 = vld [vmem:[#allocation8 + $0x4b8] sm:$0xff]
    %v636 = vld [vmem:[#allocation8 + $0x4c0] sm:$0xff]
    %v637 = vld [vmem:[#allocation8 + $0x4c8] sm:$0xff]
    %v638 = vld [vmem:[#allocation8 + $0x4d0] sm:$0xff]
    %v639 = vld [vmem:[#allocation8 + $0x4d8] sm:$0xff]
    %v640 = vld [vmem:[#allocation8 + $0x4e0] sm:$0xff]
    %v641 = vld [vmem:[#allocation8 + $0x4e8] sm:$0xff]
    %v642 = vld [vmem:[#allocation8 + $0x4f0] sm:$0xff]
    %v643 = vld [vmem:[#allocation8 + $0x4f8] sm:$0xff]
    %v644 = vld [vmem:[#allocation8 + $0x500] sm:$0xff]
    %v645 = vld [vmem:[#allocation8 + $0x508] sm:$0xff]
    %v646 = vld [vmem:[#allocation8 + $0x510] sm:$0xff]
    %v647 = vld [vmem:[#allocation8 + $0x518] sm:$0xff]
    %v648 = vld [vmem:[#allocation8 + $0x520] sm:$0xff]
    %v649 = vld [vmem:[#allocation8 + $0x528] sm:$0xff]
    %v650 = vld [vmem:[#allocation8 + $0x530] sm:$0xff]
    %v651 = vld [vmem:[#allocation8 + $0x538] sm:$0xff]
    %v652 = vld [vmem:[#allocation8 + $0x540] sm:$0xff]
    %v653 = vld [vmem:[#allocation8 + $0x548] sm:$0xff]
    %v654 = vld [vmem:[#allocation8 + $0x550] sm:$0xff]
    %v655 = vld [vmem:[#allocation8 + $0x558] sm:$0xff]
    %v656 = vld [vmem:[#allocation8 + $0x560] sm:$0xff]
    %v657 = vld [vmem:[#allocation8 + $0x568] sm:$0xff]
    %v658 = vld [vmem:[#allocation8 + $0x570] sm:$0xff]
    %v659 = vld [vmem:[#allocation8 + $0x578] sm:$0xff]
    %v660 = vld [vmem:[#allocation8 + $0x580] sm:$0xff]
    %v661 = vld [vmem:[#allocation8 + $0x588] sm:$0xff]
    %v662 = vld [vmem:[#allocation8 + $0x590] sm:$0xff]
    %v663 = vld [vmem:[#allocation8 + $0x598] sm:$0xff]
    %v664 = vld [vmem:[#allocation8 + $0x5a0] sm:$0xff]
    %v665 = vld [vmem:[#allocation8 + $0x5a8] sm:$0xff]
    %v666 = vld [vmem:[#allocation8 + $0x5b0] sm:$0xff]
    %v667 = vld [vmem:[#allocation8 + $0x5b8] sm:$0xff]
    %v668 = vld [vmem:[#allocation8 + $0x5c0] sm:$0xff]
    %v669 = vld [vmem:[#allocation8 + $0x5c8] sm:$0xff]
    %v670 = vld [vmem:[#allocation8 + $0x5d0] sm:$0xff]
    %v671 = vld [vmem:[#allocation8 + $0x5d8] sm:$0xff]
    %v672 = vld [vmem:[#allocation8 + $0x5e0] sm:$0xff]
    %v673 = vld [vmem:[#allocation8 + $0x5e8] sm:$0xff]
    %v674 = vld [vmem:[#allocation8 + $0x5f0] sm:$0xff]
    %v675 = vld [vmem:[#allocation8 + $0x5f8] sm:$0xff]
    %v676 = vld [vmem:[#allocation8 + $0x600] sm:$0xff]
    %v677 = vld [vmem:[#allocation8 + $0x608] sm:$0xff]
    %v678 = vld [vmem:[#allocation8 + $0x610] sm:$0xff]
    %v679 = vld [vmem:[#allocation8 + $0x618] sm:$0xff]
    %v680 = vld [vmem:[#allocation8 + $0x620] sm:$0xff]
    %v681 = vld [vmem:[#allocation8 + $0x628] sm:$0xff]
    %v682 = vld [vmem:[#allocation8 + $0x630] sm:$0xff]
    %v683 = vld [vmem:[#allocation8 + $0x638] sm:$0xff]
    %v684 = vld [vmem:[#allocation8 + $0x640] sm:$0xff]
    %v685 = vld [vmem:[#allocation8 + $0x648] sm:$0xff]
    %v686 = vld [vmem:[#allocation8 + $0x650] sm:$0xff]
    %v687 = vld [vmem:[#allocation8 + $0x658] sm:$0xff]
    %v688 = vld [vmem:[#allocation8 + $0x660] sm:$0xff]
    %v689 = vld [vmem:[#allocation8 + $0x668] sm:$0xff]
    %v690 = vld [vmem:[#allocation8 + $0x670] sm:$0xff]
    %v691 = vld [vmem:[#allocation8 + $0x678] sm:$0xff]
    %v692 = vld [vmem:[#allocation8 + $0x680] sm:$0xff]
    %v693 = vld [vmem:[#allocation8 + $0x688] sm:$0xff]
    %v694 = vld [vmem:[#allocation8 + $0x690] sm:$0xff]
    %v695 = vld [vmem:[#allocation8 + $0x698] sm:$0xff]
    %v696 = vld [vmem:[#allocation8 + $0x6a0] sm:$0xff]
    %v697 = vld [vmem:[#allocation8 + $0x6a8] sm:$0xff]
    %v698 = vld [vmem:[#allocation8 + $0x6b0] sm:$0xff]
    %v699 = vld [vmem:[#allocation8 + $0x6b8] sm:$0xff]
    %v700 = vld [vmem:[#allocation8 + $0x6c0] sm:$0xff]
    %v701 = vld [vmem:[#allocation8 + $0x6c8] sm:$0xff]
    %v702 = vld [vmem:[#allocation8 + $0x6d0] sm:$0xff]
    %v703 = vld [vmem:[#allocation8 + $0x6d8] sm:$0xff]
    %v704 = vld [vmem:[#allocation8 + $0x6e0] sm:$0xff]
    %v705 = vld [vmem:[#allocation8 + $0x6e8] sm:$0xff]
    %v706 = vld [vmem:[#allocation8 + $0x6f0] sm:$0xff]
    %v707 = vld [vmem:[#allocation8 + $0x6f8] sm:$0xff]
    %v708 = vld [vmem:[#allocation8 + $0x700] sm:$0xff]
    %v709 = vld [vmem:[#allocation8 + $0x708] sm:$0xff]
    %v710 = vld [vmem:[#allocation8 + $0x710] sm:$0xff]
    %v711 = vld [vmem:[#allocation8 + $0x718] sm:$0xff]
    %v712 = vld [vmem:[#allocation8 + $0x720] sm:$0xff]
    %v713 = vld [vmem:[#allocation8 + $0x728] sm:$0xff]
    %v714 = vld [vmem:[#allocation8 + $0x730] sm:$0xff]
    %v715 = vld [vmem:[#allocation8 + $0x738] sm:$0xff]
    %v716 = vld [vmem:[#allocation8 + $0x740] sm:$0xff]
    %v717 = vld [vmem:[#allocation8 + $0x748] sm:$0xff]
    %v718 = vld [vmem:[#allocation8 + $0x750] sm:$0xff]
    %v719 = vld [vmem:[#allocation8 + $0x758] sm:$0xff]
    %v720 = vld [vmem:[#allocation8 + $0x760] sm:$0xff]
    %v721 = vld [vmem:[#allocation8 + $0x768] sm:$0xff]
    %v722 = vld [vmem:[#allocation8 + $0x770] sm:$0xff]
    %v723 = vld [vmem:[#allocation8 + $0x778] sm:$0xff]
    %v724 = vld [vmem:[#allocation8 + $0x780] sm:$0xff]
    %v725 = vld [vmem:[#allocation8 + $0x788] sm:$0xff]
    %v726 = vld [vmem:[#allocation8 + $0x790] sm:$0xff]
    %v727 = vld [vmem:[#allocation8 + $0x798] sm:$0xff]
    %v728 = vld [vmem:[#allocation8 + $0x7a0] sm:$0xff]
    %v729 = vld [vmem:[#allocation8 + $0x7a8] sm:$0xff]
    %v730 = vld [vmem:[#allocation8 + $0x7b0] sm:$0xff]
    %v731 = vld [vmem:[#allocation8 + $0x7b8] sm:$0xff]
    %v732 = vld [vmem:[#allocation8 + $0x7c0] sm:$0xff]
    %v733 = vld [vmem:[#allocation8 + $0x7c8] sm:$0xff]
    %v734 = vld [vmem:[#allocation8 + $0x7d0] sm:$0xff]
    %v735 = vld [vmem:[#allocation8 + $0x7d8] sm:$0xff]
    %v736 = vld [vmem:[#allocation8 + $0x7e0] sm:$0xff]
    %v737 = vld [vmem:[#allocation8 + $0x7e8] sm:$0xff]
    %v738 = vld [vmem:[#allocation8 + $0x7f0] sm:$0xff]
    %v739 = vld [vmem:[#allocation8 + $0x7f8] sm:$0xff]
    %v740 = vld [vmem:[%s6] sm:$0xf]
    %v742 = vperm.slane %v740, 0
    %v743 = vperm.slane %v740, 1
    %v744 = vperm.slane %v740, 2
    %v745 = vperm.slane %v740, 3
    %v1006 = vunpack.c.l.b16 %v484
    %v1007 = vunpack.c.h.b16 %v484
    %v1008 = vunpack.c.l.b16 %v485
    %v1009 = vunpack.c.h.b16 %v485
    %v1010 = vunpack.c.l.b16 %v486
    %v1011 = vunpack.c.h.b16 %v486
    %v1012 = vunpack.c.l.b16 %v487
    %v1013 = vunpack.c.h.b16 %v487
    %v1014 = vunpack.c.l.b16 %v488
    %v1015 = vunpack.c.h.b16 %v488
    %v1016 = vunpack.c.l.b16 %v489
    %v1017 = vunpack.c.h.b16 %v489
    %v1018 = vunpack.c.l.b16 %v490
    %v1019 = vunpack.c.h.b16 %v490
    %v1020 = vunpack.c.l.b16 %v491
    %v1021 = vunpack.c.h.b16 %v491
    %v1022 = vunpack.c.l.b16 %v492
    %v1023 = vunpack.c.h.b16 %v492
    %v1024 = vunpack.c.l.b16 %v493
    %v1025 = vunpack.c.h.b16 %v493
    %v1026 = vunpack.c.l.b16 %v494
    %v1027 = vunpack.c.h.b16 %v494
    %v1028 = vunpack.c.l.b16 %v495
    %v1029 = vunpack.c.h.b16 %v495
    %v1030 = vunpack.c.l.b16 %v496
    %v1031 = vunpack.c.h.b16 %v496
    %v1032 = vunpack.c.l.b16 %v497
    %v1033 = vunpack.c.h.b16 %v497
    %v1034 = vunpack.c.l.b16 %v498
    %v1035 = vunpack.c.h.b16 %v498
    %v1036 = vunpack.c.l.b16 %v499
    %v1037 = vunpack.c.h.b16 %v499
    %v1038 = vunpack.c.l.b16 %v500
    %v1039 = vunpack.c.h.b16 %v500
    %v1040 = vunpack.c.l.b16 %v501
    %v1041 = vunpack.c.h.b16 %v501
    %v1042 = vunpack.c.l.b16 %v502
    %v1043 = vunpack.c.h.b16 %v502
    %v1044 = vunpack.c.l.b16 %v503
    %v1045 = vunpack.c.h.b16 %v503
    %v1046 = vunpack.c.l.b16 %v504
    %v1047 = vunpack.c.h.b16 %v504
    %v1048 = vunpack.c.l.b16 %v505
    %v1049 = vunpack.c.h.b16 %v505
    %v1050 = vunpack.c.l.b16 %v506
    %v1051 = vunpack.c.h.b16 %v506
    %v1052 = vunpack.c.l.b16 %v507
    %v1053 = vunpack.c.h.b16 %v507
    %v1054 = vunpack.c.l.b16 %v508
    %v1055 = vunpack.c.h.b16 %v508
    %v1056 = vunpack.c.l.b16 %v509
    %v1057 = vunpack.c.h.b16 %v509
    %v1058 = vunpack.c.l.b16 %v510
    %v1059 = vunpack.c.h.b16 %v510
    %v1060 = vunpack.c.l.b16 %v511
    %v1061 = vunpack.c.h.b16 %v511
    %v1062 = vunpack.c.l.b16 %v512
    %v1063 = vunpack.c.h.b16 %v512
    %v1064 = vunpack.c.l.b16 %v513
    %v1065 = vunpack.c.h.b16 %v513
    %v1066 = vunpack.c.l.b16 %v514
    %v1067 = vunpack.c.h.b16 %v514
    %v1068 = vunpack.c.l.b16 %v515
    %v1069 = vunpack.c.h.b16 %v515
    %v1070 = vunpack.c.l.b16 %v516
    %v1071 = vunpack.c.h.b16 %v516
    %v1072 = vunpack.c.l.b16 %v517
    %v1073 = vunpack.c.h.b16 %v517
    %v1074 = vunpack.c.l.b16 %v518
    %v1075 = vunpack.c.h.b16 %v518
    %v1076 = vunpack.c.l.b16 %v519
    %v1077 = vunpack.c.h.b16 %v519
    %v1078 = vunpack.c.l.b16 %v520
    %v1079 = vunpack.c.h.b16 %v520
    %v1080 = vunpack.c.l.b16 %v521
    %v1081 = vunpack.c.h.b16 %v521
    %v1082 = vunpack.c.l.b16 %v522
    %v1083 = vunpack.c.h.b16 %v522
    %v1084 = vunpack.c.l.b16 %v523
    %v1085 = vunpack.c.h.b16 %v523
    %v1086 = vunpack.c.l.b16 %v524
    %v1087 = vunpack.c.h.b16 %v524
    %v1088 = vunpack.c.l.b16 %v525
    %v1089 = vunpack.c.h.b16 %v525
    %v1090 = vunpack.c.l.b16 %v526
    %v1091 = vunpack.c.h.b16 %v526
    %v1092 = vunpack.c.l.b16 %v527
    %v1093 = vunpack.c.h.b16 %v527
    %v1094 = vunpack.c.l.b16 %v528
    %v1095 = vunpack.c.h.b16 %v528
    %v1096 = vunpack.c.l.b16 %v529
    %v1097 = vunpack.c.h.b16 %v529
    %v1098 = vunpack.c.l.b16 %v530
    %v1099 = vunpack.c.h.b16 %v530
    %v1100 = vunpack.c.l.b16 %v531
    %v1101 = vunpack.c.h.b16 %v531
    %v1102 = vunpack.c.l.b16 %v532
    %v1103 = vunpack.c.h.b16 %v532
    %v1104 = vunpack.c.l.b16 %v533
    %v1105 = vunpack.c.h.b16 %v533
    %v1106 = vunpack.c.l.b16 %v534
    %v1107 = vunpack.c.h.b16 %v534
    %v1108 = vunpack.c.l.b16 %v535
    %v1109 = vunpack.c.h.b16 %v535
    %v1110 = vunpack.c.l.b16 %v536
    %v1111 = vunpack.c.h.b16 %v536
    %v1112 = vunpack.c.l.b16 %v537
    %v1113 = vunpack.c.h.b16 %v537
    %v1114 = vunpack.c.l.b16 %v538
    %v1115 = vunpack.c.h.b16 %v538
    %v1116 = vunpack.c.l.b16 %v539
    %v1117 = vunpack.c.h.b16 %v539
    %v1118 = vunpack.c.l.b16 %v540
    %v1119 = vunpack.c.h.b16 %v540
    %v1120 = vunpack.c.l.b16 %v541
    %v1121 = vunpack.c.h.b16 %v541
    %v1122 = vunpack.c.l.b16 %v542
    %v1123 = vunpack.c.h.b16 %v542
    %v1124 = vunpack.c.l.b16 %v543
    %v1125 = vunpack.c.h.b16 %v543
    %v1126 = vunpack.c.l.b16 %v544
    %v1127 = vunpack.c.h.b16 %v544
    %v1128 = vunpack.c.l.b16 %v545
    %v1129 = vunpack.c.h.b16 %v545
    %v1130 = vunpack.c.l.b16 %v546
    %v1131 = vunpack.c.h.b16 %v546
    %v1132 = vunpack.c.l.b16 %v547
    %v1133 = vunpack.c.h.b16 %v547
    %v1134 = vunpack.c.l.b16 %v548
    %v1135 = vunpack.c.h.b16 %v548
    %v1136 = vunpack.c.l.b16 %v549
    %v1137 = vunpack.c.h.b16 %v549
    %v1138 = vunpack.c.l.b16 %v550
    %v1139 = vunpack.c.h.b16 %v550
    %v1140 = vunpack.c.l.b16 %v551
    %v1141 = vunpack.c.h.b16 %v551
    %v1142 = vunpack.c.l.b16 %v552
    %v1143 = vunpack.c.h.b16 %v552
    %v1144 = vunpack.c.l.b16 %v553
    %v1145 = vunpack.c.h.b16 %v553
    %v1146 = vunpack.c.l.b16 %v554
    %v1147 = vunpack.c.h.b16 %v554
    %v1148 = vunpack.c.l.b16 %v555
    %v1149 = vunpack.c.h.b16 %v555
    %v1150 = vunpack.c.l.b16 %v556
    %v1151 = vunpack.c.h.b16 %v556
    %v1152 = vunpack.c.l.b16 %v557
    %v1153 = vunpack.c.h.b16 %v557
    %v1154 = vunpack.c.l.b16 %v558
    %v1155 = vunpack.c.h.b16 %v558
    %v1156 = vunpack.c.l.b16 %v559
    %v1157 = vunpack.c.h.b16 %v559
    %v1158 = vunpack.c.l.b16 %v560
    %v1159 = vunpack.c.h.b16 %v560
    %v1160 = vunpack.c.l.b16 %v561
    %v1161 = vunpack.c.h.b16 %v561
    %v1162 = vunpack.c.l.b16 %v562
    %v1163 = vunpack.c.h.b16 %v562
    %v1164 = vunpack.c.l.b16 %v563
    %v1165 = vunpack.c.h.b16 %v563
    %v1166 = vunpack.c.l.b16 %v564
    %v1167 = vunpack.c.h.b16 %v564
    %v1168 = vunpack.c.l.b16 %v565
    %v1169 = vunpack.c.h.b16 %v565
    %v1170 = vunpack.c.l.b16 %v566
    %v1171 = vunpack.c.h.b16 %v566
    %v1172 = vunpack.c.l.b16 %v567
    %v1173 = vunpack.c.h.b16 %v567
    %v1174 = vunpack.c.l.b16 %v568
    %v1175 = vunpack.c.h.b16 %v568
    %v1176 = vunpack.c.l.b16 %v569
    %v1177 = vunpack.c.h.b16 %v569
    %v1178 = vunpack.c.l.b16 %v570
    %v1179 = vunpack.c.h.b16 %v570
    %v1180 = vunpack.c.l.b16 %v571
    %v1181 = vunpack.c.h.b16 %v571
    %v1182 = vunpack.c.l.b16 %v572
    %v1183 = vunpack.c.h.b16 %v572
    %v1184 = vunpack.c.l.b16 %v573
    %v1185 = vunpack.c.h.b16 %v573
    %v1186 = vunpack.c.l.b16 %v574
    %v1187 = vunpack.c.h.b16 %v574
    %v1188 = vunpack.c.l.b16 %v575
    %v1189 = vunpack.c.h.b16 %v575
    %v1190 = vunpack.c.l.b16 %v576
    %v1191 = vunpack.c.h.b16 %v576
    %v1192 = vunpack.c.l.b16 %v577
    %v1193 = vunpack.c.h.b16 %v577
    %v1194 = vunpack.c.l.b16 %v578
    %v1195 = vunpack.c.h.b16 %v578
    %v1196 = vunpack.c.l.b16 %v579
    %v1197 = vunpack.c.h.b16 %v579
    %v1198 = vunpack.c.l.b16 %v580
    %v1199 = vunpack.c.h.b16 %v580
    %v1200 = vunpack.c.l.b16 %v581
    %v1201 = vunpack.c.h.b16 %v581
    %v1202 = vunpack.c.l.b16 %v582
    %v1203 = vunpack.c.h.b16 %v582
    %v1204 = vunpack.c.l.b16 %v583
    %v1205 = vunpack.c.h.b16 %v583
    %v1206 = vunpack.c.l.b16 %v584
    %v1207 = vunpack.c.h.b16 %v584
    %v1208 = vunpack.c.l.b16 %v585
    %v1209 = vunpack.c.h.b16 %v585
    %v1210 = vunpack.c.l.b16 %v586
    %v1211 = vunpack.c.h.b16 %v586
    %v1212 = vunpack.c.l.b16 %v587
    %v1213 = vunpack.c.h.b16 %v587
    %v1214 = vunpack.c.l.b16 %v588
    %v1215 = vunpack.c.h.b16 %v588
    %v1216 = vunpack.c.l.b16 %v589
    %v1217 = vunpack.c.h.b16 %v589
    %v1218 = vunpack.c.l.b16 %v590
    %v1219 = vunpack.c.h.b16 %v590
    %v1220 = vunpack.c.l.b16 %v591
    %v1221 = vunpack.c.h.b16 %v591
    %v1222 = vunpack.c.l.b16 %v592
    %v1223 = vunpack.c.h.b16 %v592
    %v1224 = vunpack.c.l.b16 %v593
    %v1225 = vunpack.c.h.b16 %v593
    %v1226 = vunpack.c.l.b16 %v594
    %v1227 = vunpack.c.h.b16 %v594
    %v1228 = vunpack.c.l.b16 %v595
    %v1229 = vunpack.c.h.b16 %v595
    %v1230 = vunpack.c.l.b16 %v596
    %v1231 = vunpack.c.h.b16 %v596
    %v1232 = vunpack.c.l.b16 %v597
    %v1233 = vunpack.c.h.b16 %v597
    %v1234 = vunpack.c.l.b16 %v598
    %v1235 = vunpack.c.h.b16 %v598
    %v1236 = vunpack.c.l.b16 %v599
    %v1237 = vunpack.c.h.b16 %v599
    %v1238 = vunpack.c.l.b16 %v600
    %v1239 = vunpack.c.h.b16 %v600
    %v1240 = vunpack.c.l.b16 %v601
    %v1241 = vunpack.c.h.b16 %v601
    %v1242 = vunpack.c.l.b16 %v602
    %v1243 = vunpack.c.h.b16 %v602
    %v1244 = vunpack.c.l.b16 %v603
    %v1245 = vunpack.c.h.b16 %v603
    %v1246 = vunpack.c.l.b16 %v604
    %v1247 = vunpack.c.h.b16 %v604
    %v1248 = vunpack.c.l.b16 %v605
    %v1249 = vunpack.c.h.b16 %v605
    %v1250 = vunpack.c.l.b16 %v606
    %v1251 = vunpack.c.h.b16 %v606
    %v1252 = vunpack.c.l.b16 %v607
    %v1253 = vunpack.c.h.b16 %v607
    %v1254 = vunpack.c.l.b16 %v608
    %v1255 = vunpack.c.h.b16 %v608
    %v1256 = vunpack.c.l.b16 %v609
    %v1257 = vunpack.c.h.b16 %v609
    %v1258 = vunpack.c.l.b16 %v610
    %v1259 = vunpack.c.h.b16 %v610
    %v1260 = vunpack.c.l.b16 %v611
    %v1261 = vunpack.c.h.b16 %v611
    %v1262 = vunpack.c.l.b16 %v612
    %v1263 = vunpack.c.h.b16 %v612
    %v1264 = vunpack.c.l.b16 %v613
    %v1265 = vunpack.c.h.b16 %v613
    %v1266 = vunpack.c.l.b16 %v614
    %v1267 = vunpack.c.h.b16 %v614
    %v1268 = vunpack.c.l.b16 %v615
    %v1269 = vunpack.c.h.b16 %v615
    %v1270 = vunpack.c.l.b16 %v616
    %v1271 = vunpack.c.h.b16 %v616
    %v1272 = vunpack.c.l.b16 %v617
    %v1273 = vunpack.c.h.b16 %v617
    %v1274 = vunpack.c.l.b16 %v618
    %v1275 = vunpack.c.h.b16 %v618
    %v1276 = vunpack.c.l.b16 %v619
    %v1277 = vunpack.c.h.b16 %v619
    %v1278 = vunpack.c.l.b16 %v620
    %v1279 = vunpack.c.h.b16 %v620
    %v1280 = vunpack.c.l.b16 %v621
    %v1281 = vunpack.c.h.b16 %v621
    %v1282 = vunpack.c.l.b16 %v622
    %v1283 = vunpack.c.h.b16 %v622
    %v1284 = vunpack.c.l.b16 %v623
    %v1285 = vunpack.c.h.b16 %v623
    %v1286 = vunpack.c.l.b16 %v624
    %v1287 = vunpack.c.h.b16 %v624
    %v1288 = vunpack.c.l.b16 %v625
    %v1289 = vunpack.c.h.b16 %v625
    %v1290 = vunpack.c.l.b16 %v626
    %v1291 = vunpack.c.h.b16 %v626
    %v1292 = vunpack.c.l.b16 %v627
    %v1293 = vunpack.c.h.b16 %v627
    %v1294 = vunpack.c.l.b16 %v628
    %v1295 = vunpack.c.h.b16 %v628
    %v1296 = vunpack.c.l.b16 %v629
    %v1297 = vunpack.c.h.b16 %v629
    %v1298 = vunpack.c.l.b16 %v630
    %v1299 = vunpack.c.h.b16 %v630
    %v1300 = vunpack.c.l.b16 %v631
    %v1301 = vunpack.c.h.b16 %v631
    %v1302 = vunpack.c.l.b16 %v632
    %v1303 = vunpack.c.h.b16 %v632
    %v1304 = vunpack.c.l.b16 %v633
    %v1305 = vunpack.c.h.b16 %v633
    %v1306 = vunpack.c.l.b16 %v634
    %v1307 = vunpack.c.h.b16 %v634
    %v1308 = vunpack.c.l.b16 %v635
    %v1309 = vunpack.c.h.b16 %v635
    %v1310 = vunpack.c.l.b16 %v636
    %v1311 = vunpack.c.h.b16 %v636
    %v1312 = vunpack.c.l.b16 %v637
    %v1313 = vunpack.c.h.b16 %v637
    %v1314 = vunpack.c.l.b16 %v638
    %v1315 = vunpack.c.h.b16 %v638
    %v1316 = vunpack.c.l.b16 %v639
    %v1317 = vunpack.c.h.b16 %v639
    %v1318 = vunpack.c.l.b16 %v640
    %v1319 = vunpack.c.h.b16 %v640
    %v1320 = vunpack.c.l.b16 %v641
    %v1321 = vunpack.c.h.b16 %v641
    %v1322 = vunpack.c.l.b16 %v642
    %v1323 = vunpack.c.h.b16 %v642
    %v1324 = vunpack.c.l.b16 %v643
    %v1325 = vunpack.c.h.b16 %v643
    %v1326 = vunpack.c.l.b16 %v644
    %v1327 = vunpack.c.h.b16 %v644
    %v1328 = vunpack.c.l.b16 %v645
    %v1329 = vunpack.c.h.b16 %v645
    %v1330 = vunpack.c.l.b16 %v646
    %v1331 = vunpack.c.h.b16 %v646
    %v1332 = vunpack.c.l.b16 %v647
    %v1333 = vunpack.c.h.b16 %v647
    %v1334 = vunpack.c.l.b16 %v648
    %v1335 = vunpack.c.h.b16 %v648
    %v1336 = vunpack.c.l.b16 %v649
    %v1337 = vunpack.c.h.b16 %v649
    %v1338 = vunpack.c.l.b16 %v650
    %v1339 = vunpack.c.h.b16 %v650
    %v1340 = vunpack.c.l.b16 %v651
    %v1341 = vunpack.c.h.b16 %v651
    %v1342 = vunpack.c.l.b16 %v652
    %v1343 = vunpack.c.h.b16 %v652
    %v1344 = vunpack.c.l.b16 %v653
    %v1345 = vunpack.c.h.b16 %v653
    %v1346 = vunpack.c.l.b16 %v654
    %v1347 = vunpack.c.h.b16 %v654
    %v1348 = vunpack.c.l.b16 %v655
    %v1349 = vunpack.c.h.b16 %v655
    %v1350 = vunpack.c.l.b16 %v656
    %v1351 = vunpack.c.h.b16 %v656
    %v1352 = vunpack.c.l.b16 %v657
    %v1353 = vunpack.c.h.b16 %v657
    %v1354 = vunpack.c.l.b16 %v658
    %v1355 = vunpack.c.h.b16 %v658
    %v1356 = vunpack.c.l.b16 %v659
    %v1357 = vunpack.c.h.b16 %v659
    %v1358 = vunpack.c.l.b16 %v660
    %v1359 = vunpack.c.h.b16 %v660
    %v1360 = vunpack.c.l.b16 %v661
    %v1361 = vunpack.c.h.b16 %v661
    %v1362 = vunpack.c.l.b16 %v662
    %v1363 = vunpack.c.h.b16 %v662
    %v1364 = vunpack.c.l.b16 %v663
    %v1365 = vunpack.c.h.b16 %v663
    %v1366 = vunpack.c.l.b16 %v664
    %v1367 = vunpack.c.h.b16 %v664
    %v1368 = vunpack.c.l.b16 %v665
    %v1369 = vunpack.c.h.b16 %v665
    %v1370 = vunpack.c.l.b16 %v666
    %v1371 = vunpack.c.h.b16 %v666
    %v1372 = vunpack.c.l.b16 %v667
    %v1373 = vunpack.c.h.b16 %v667
    %v1374 = vunpack.c.l.b16 %v668
    %v1375 = vunpack.c.h.b16 %v668
    %v1376 = vunpack.c.l.b16 %v669
    %v1377 = vunpack.c.h.b16 %v669
    %v1378 = vunpack.c.l.b16 %v670
    %v1379 = vunpack.c.h.b16 %v670
    %v1380 = vunpack.c.l.b16 %v671
    %v1381 = vunpack.c.h.b16 %v671
    %v1382 = vunpack.c.l.b16 %v672
    %v1383 = vunpack.c.h.b16 %v672
    %v1384 = vunpack.c.l.b16 %v673
    %v1385 = vunpack.c.h.b16 %v673
    %v1386 = vunpack.c.l.b16 %v674
    %v1387 = vunpack.c.h.b16 %v674
    %v1388 = vunpack.c.l.b16 %v675
    %v1389 = vunpack.c.h.b16 %v675
    %v1390 = vunpack.c.l.b16 %v676
    %v1391 = vunpack.c.h.b16 %v676
    %v1392 = vunpack.c.l.b16 %v677
    %v1393 = vunpack.c.h.b16 %v677
    %v1394 = vunpack.c.l.b16 %v678
    %v1395 = vunpack.c.h.b16 %v678
    %v1396 = vunpack.c.l.b16 %v679
    %v1397 = vunpack.c.h.b16 %v679
    %v1398 = vunpack.c.l.b16 %v680
    %v1399 = vunpack.c.h.b16 %v680
    %v1400 = vunpack.c.l.b16 %v681
    %v1401 = vunpack.c.h.b16 %v681
    %v1402 = vunpack.c.l.b16 %v682
    %v1403 = vunpack.c.h.b16 %v682
    %v1404 = vunpack.c.l.b16 %v683
    %v1405 = vunpack.c.h.b16 %v683
    %v1406 = vunpack.c.l.b16 %v684
    %v1407 = vunpack.c.h.b16 %v684
    %v1408 = vunpack.c.l.b16 %v685
    %v1409 = vunpack.c.h.b16 %v685
    %v1410 = vunpack.c.l.b16 %v686
    %v1411 = vunpack.c.h.b16 %v686
    %v1412 = vunpack.c.l.b16 %v687
    %v1413 = vunpack.c.h.b16 %v687
    %v1414 = vunpack.c.l.b16 %v688
    %v1415 = vunpack.c.h.b16 %v688
    %v1416 = vunpack.c.l.b16 %v689
    %v1417 = vunpack.c.h.b16 %v689
    %v1418 = vunpack.c.l.b16 %v690
    %v1419 = vunpack.c.h.b16 %v690
    %v1420 = vunpack.c.l.b16 %v691
    %v1421 = vunpack.c.h.b16 %v691
    %v1422 = vunpack.c.l.b16 %v692
    %v1423 = vunpack.c.h.b16 %v692
    %v1424 = vunpack.c.l.b16 %v693
    %v1425 = vunpack.c.h.b16 %v693
    %v1426 = vunpack.c.l.b16 %v694
    %v1427 = vunpack.c.h.b16 %v694
    %v1428 = vunpack.c.l.b16 %v695
    %v1429 = vunpack.c.h.b16 %v695
    %v1430 = vunpack.c.l.b16 %v696
    %v1431 = vunpack.c.h.b16 %v696
    %v1432 = vunpack.c.l.b16 %v697
    %v1433 = vunpack.c.h.b16 %v697
    %v1434 = vunpack.c.l.b16 %v698
    %v1435 = vunpack.c.h.b16 %v698
    %v1436 = vunpack.c.l.b16 %v699
    %v1437 = vunpack.c.h.b16 %v699
    %v1438 = vunpack.c.l.b16 %v700
    %v1439 = vunpack.c.h.b16 %v700
    %v1440 = vunpack.c.l.b16 %v701
    %v1441 = vunpack.c.h.b16 %v701
    %v1442 = vunpack.c.l.b16 %v702
    %v1443 = vunpack.c.h.b16 %v702
    %v1444 = vunpack.c.l.b16 %v703
    %v1445 = vunpack.c.h.b16 %v703
    %v1446 = vunpack.c.l.b16 %v704
    %v1447 = vunpack.c.h.b16 %v704
    %v1448 = vunpack.c.l.b16 %v705
    %v1449 = vunpack.c.h.b16 %v705
    %v1450 = vunpack.c.l.b16 %v706
    %v1451 = vunpack.c.h.b16 %v706
    %v1452 = vunpack.c.l.b16 %v707
    %v1453 = vunpack.c.h.b16 %v707
    %v1454 = vunpack.c.l.b16 %v708
    %v1455 = vunpack.c.h.b16 %v708
    %v1456 = vunpack.c.l.b16 %v709
    %v1457 = vunpack.c.h.b16 %v709
    %v1458 = vunpack.c.l.b16 %v710
    %v1459 = vunpack.c.h.b16 %v710
    %v1460 = vunpack.c.l.b16 %v711
    %v1461 = vunpack.c.h.b16 %v711
    %v1462 = vunpack.c.l.b16 %v712
    %v1463 = vunpack.c.h.b16 %v712
    %v1464 = vunpack.c.l.b16 %v713
    %v1465 = vunpack.c.h.b16 %v713
    %v1466 = vunpack.c.l.b16 %v714
    %v1467 = vunpack.c.h.b16 %v714
    %v1468 = vunpack.c.l.b16 %v715
    %v1469 = vunpack.c.h.b16 %v715
    %v1470 = vunpack.c.l.b16 %v716
    %v1471 = vunpack.c.h.b16 %v716
    %v1472 = vunpack.c.l.b16 %v717
    %v1473 = vunpack.c.h.b16 %v717
    %v1474 = vunpack.c.l.b16 %v718
    %v1475 = vunpack.c.h.b16 %v718
    %v1476 = vunpack.c.l.b16 %v719
    %v1477 = vunpack.c.h.b16 %v719
    %v1478 = vunpack.c.l.b16 %v720
    %v1479 = vunpack.c.h.b16 %v720
    %v1480 = vunpack.c.l.b16 %v721
    %v1481 = vunpack.c.h.b16 %v721
    %v1482 = vunpack.c.l.b16 %v722
    %v1483 = vunpack.c.h.b16 %v722
    %v1484 = vunpack.c.l.b16 %v723
    %v1485 = vunpack.c.h.b16 %v723
    %v1486 = vunpack.c.l.b16 %v724
    %v1487 = vunpack.c.h.b16 %v724
    %v1488 = vunpack.c.l.b16 %v725
    %v1489 = vunpack.c.h.b16 %v725
    %v1490 = vunpack.c.l.b16 %v726
    %v1491 = vunpack.c.h.b16 %v726
    %v1492 = vunpack.c.l.b16 %v727
    %v1493 = vunpack.c.h.b16 %v727
    %v1494 = vunpack.c.l.b16 %v728
    %v1495 = vunpack.c.h.b16 %v728
    %v1496 = vunpack.c.l.b16 %v729
    %v1497 = vunpack.c.h.b16 %v729
    %v1498 = vunpack.c.l.b16 %v730
    %v1499 = vunpack.c.h.b16 %v730
    %v1500 = vunpack.c.l.b16 %v731
    %v1501 = vunpack.c.h.b16 %v731
    %v1502 = vunpack.c.l.b16 %v732
    %v1503 = vunpack.c.h.b16 %v732
    %v1504 = vunpack.c.l.b16 %v733
    %v1505 = vunpack.c.h.b16 %v733
    %v1506 = vunpack.c.l.b16 %v734
    %v1507 = vunpack.c.h.b16 %v734
    %v1508 = vunpack.c.l.b16 %v735
    %v1509 = vunpack.c.h.b16 %v735
    %v1510 = vunpack.c.l.b16 %v736
    %v1511 = vunpack.c.h.b16 %v736
    %v1512 = vunpack.c.l.b16 %v737
    %v1513 = vunpack.c.h.b16 %v737
    %v1514 = vunpack.c.l.b16 %v738
    %v1515 = vunpack.c.h.b16 %v738
    %v1516 = vunpack.c.l.b16 %v739
    %v1517 = vunpack.c.h.b16 %v739
    %v1518 = vpack.c.b16 %v1010, %v1006
    %v1519 = vpack.c.b16 %v1011, %v1007
    %v1520 = vpack.c.b16 %v1012, %v1008
    %v1521 = vpack.c.b16 %v1013, %v1009
    %v1522 = vpack.c.b16 %v1018, %v1014
    %v1523 = vpack.c.b16 %v1019, %v1015
    %v1524 = vpack.c.b16 %v1020, %v1016
    %v1525 = vpack.c.b16 %v1021, %v1017
    %v1526 = vpack.c.b16 %v1026, %v1022
    %v1527 = vpack.c.b16 %v1027, %v1023
    %v1528 = vpack.c.b16 %v1028, %v1024
    %v1529 = vpack.c.b16 %v1029, %v1025
    %v1530 = vpack.c.b16 %v1034, %v1030
    %v1531 = vpack.c.b16 %v1035, %v1031
    %v1532 = vpack.c.b16 %v1036, %v1032
    %v1533 = vpack.c.b16 %v1037, %v1033
    %v1534 = vpack.c.b16 %v1042, %v1038
    %v1535 = vpack.c.b16 %v1043, %v1039
    %v1536 = vpack.c.b16 %v1044, %v1040
    %v1537 = vpack.c.b16 %v1045, %v1041
    %v1538 = vpack.c.b16 %v1050, %v1046
    %v1539 = vpack.c.b16 %v1051, %v1047
    %v1540 = vpack.c.b16 %v1052, %v1048
    %v1541 = vpack.c.b16 %v1053, %v1049
    %v1542 = vpack.c.b16 %v1058, %v1054
    %v1543 = vpack.c.b16 %v1059, %v1055
    %v1544 = vpack.c.b16 %v1060, %v1056
    %v1545 = vpack.c.b16 %v1061, %v1057
    %v1546 = vpack.c.b16 %v1066, %v1062
    %v1547 = vpack.c.b16 %v1067, %v1063
    %v1548 = vpack.c.b16 %v1068, %v1064
    %v1549 = vpack.c.b16 %v1069, %v1065
    %v1550 = vpack.c.b16 %v1074, %v1070
    %v1551 = vpack.c.b16 %v1075, %v1071
    %v1552 = vpack.c.b16 %v1076, %v1072
    %v1553 = vpack.c.b16 %v1077, %v1073
    %v1554 = vpack.c.b16 %v1082, %v1078
    %v1555 = vpack.c.b16 %v1083, %v1079
    %v1556 = vpack.c.b16 %v1084, %v1080
    %v1557 = vpack.c.b16 %v1085, %v1081
    %v1558 = vpack.c.b16 %v1090, %v1086
    %v1559 = vpack.c.b16 %v1091, %v1087
    %v1560 = vpack.c.b16 %v1092, %v1088
    %v1561 = vpack.c.b16 %v1093, %v1089
    %v1562 = vpack.c.b16 %v1098, %v1094
    %v1563 = vpack.c.b16 %v1099, %v1095
    %v1564 = vpack.c.b16 %v1100, %v1096
    %v1565 = vpack.c.b16 %v1101, %v1097
    %v1566 = vpack.c.b16 %v1106, %v1102
    %v1567 = vpack.c.b16 %v1107, %v1103
    %v1568 = vpack.c.b16 %v1108, %v1104
    %v1569 = vpack.c.b16 %v1109, %v1105
    %v1570 = vpack.c.b16 %v1114, %v1110
    %v1571 = vpack.c.b16 %v1115, %v1111
    %v1572 = vpack.c.b16 %v1116, %v1112
    %v1573 = vpack.c.b16 %v1117, %v1113
    %v1574 = vpack.c.b16 %v1122, %v1118
    %v1575 = vpack.c.b16 %v1123, %v1119
    %v1576 = vpack.c.b16 %v1124, %v1120
    %v1577 = vpack.c.b16 %v1125, %v1121
    %v1578 = vpack.c.b16 %v1130, %v1126
    %v1579 = vpack.c.b16 %v1131, %v1127
    %v1580 = vpack.c.b16 %v1132, %v1128
    %v1581 = vpack.c.b16 %v1133, %v1129
    %v1582 = vpack.c.b16 %v1138, %v1134
    %v1583 = vpack.c.b16 %v1139, %v1135
    %v1584 = vpack.c.b16 %v1140, %v1136
    %v1585 = vpack.c.b16 %v1141, %v1137
    %v1586 = vpack.c.b16 %v1146, %v1142
    %v1587 = vpack.c.b16 %v1147, %v1143
    %v1588 = vpack.c.b16 %v1148, %v1144
    %v1589 = vpack.c.b16 %v1149, %v1145
    %v1590 = vpack.c.b16 %v1154, %v1150
    %v1591 = vpack.c.b16 %v1155, %v1151
    %v1592 = vpack.c.b16 %v1156, %v1152
    %v1593 = vpack.c.b16 %v1157, %v1153
    %v1594 = vpack.c.b16 %v1162, %v1158
    %v1595 = vpack.c.b16 %v1163, %v1159
    %v1596 = vpack.c.b16 %v1164, %v1160
    %v1597 = vpack.c.b16 %v1165, %v1161
    %v1598 = vpack.c.b16 %v1170, %v1166
    %v1599 = vpack.c.b16 %v1171, %v1167
    %v1600 = vpack.c.b16 %v1172, %v1168
    %v1601 = vpack.c.b16 %v1173, %v1169
    %v1602 = vpack.c.b16 %v1178, %v1174
    %v1603 = vpack.c.b16 %v1179, %v1175
    %v1604 = vpack.c.b16 %v1180, %v1176
    %v1605 = vpack.c.b16 %v1181, %v1177
    %v1606 = vpack.c.b16 %v1186, %v1182
    %v1607 = vpack.c.b16 %v1187, %v1183
    %v1608 = vpack.c.b16 %v1188, %v1184
    %v1609 = vpack.c.b16 %v1189, %v1185
    %v1610 = vpack.c.b16 %v1194, %v1190
    %v1611 = vpack.c.b16 %v1195, %v1191
    %v1612 = vpack.c.b16 %v1196, %v1192
    %v1613 = vpack.c.b16 %v1197, %v1193
    %v1614 = vpack.c.b16 %v1202, %v1198
    %v1615 = vpack.c.b16 %v1203, %v1199
    %v1616 = vpack.c.b16 %v1204, %v1200
    %v1617 = vpack.c.b16 %v1205, %v1201
    %v1618 = vpack.c.b16 %v1210, %v1206
    %v1619 = vpack.c.b16 %v1211, %v1207
    %v1620 = vpack.c.b16 %v1212, %v1208
    %v1621 = vpack.c.b16 %v1213, %v1209
    %v1622 = vpack.c.b16 %v1218, %v1214
    %v1623 = vpack.c.b16 %v1219, %v1215
    %v1624 = vpack.c.b16 %v1220, %v1216
    %v1625 = vpack.c.b16 %v1221, %v1217
    %v1626 = vpack.c.b16 %v1226, %v1222
    %v1627 = vpack.c.b16 %v1227, %v1223
    %v1628 = vpack.c.b16 %v1228, %v1224
    %v1629 = vpack.c.b16 %v1229, %v1225
    %v1630 = vpack.c.b16 %v1234, %v1230
    %v1631 = vpack.c.b16 %v1235, %v1231
    %v1632 = vpack.c.b16 %v1236, %v1232
    %v1633 = vpack.c.b16 %v1237, %v1233
    %v1634 = vpack.c.b16 %v1242, %v1238
    %v1635 = vpack.c.b16 %v1243, %v1239
    %v1636 = vpack.c.b16 %v1244, %v1240
    %v1637 = vpack.c.b16 %v1245, %v1241
    %v1638 = vpack.c.b16 %v1250, %v1246
    %v1639 = vpack.c.b16 %v1251, %v1247
    %v1640 = vpack.c.b16 %v1252, %v1248
    %v1641 = vpack.c.b16 %v1253, %v1249
    %v1642 = vpack.c.b16 %v1258, %v1254
    %v1643 = vpack.c.b16 %v1259, %v1255
    %v1644 = vpack.c.b16 %v1260, %v1256
    %v1645 = vpack.c.b16 %v1261, %v1257
    %v1646 = vpack.c.b16 %v1266, %v1262
    %v1647 = vpack.c.b16 %v1267, %v1263
    %v1648 = vpack.c.b16 %v1268, %v1264
    %v1649 = vpack.c.b16 %v1269, %v1265
    %v1650 = vpack.c.b16 %v1274, %v1270
    %v1651 = vpack.c.b16 %v1275, %v1271
    %v1652 = vpack.c.b16 %v1276, %v1272
    %v1653 = vpack.c.b16 %v1277, %v1273
    %v1654 = vpack.c.b16 %v1282, %v1278
    %v1655 = vpack.c.b16 %v1283, %v1279
    %v1656 = vpack.c.b16 %v1284, %v1280
    %v1657 = vpack.c.b16 %v1285, %v1281
    %v1658 = vpack.c.b16 %v1290, %v1286
    %v1659 = vpack.c.b16 %v1291, %v1287
    %v1660 = vpack.c.b16 %v1292, %v1288
    %v1661 = vpack.c.b16 %v1293, %v1289
    %v1662 = vpack.c.b16 %v1298, %v1294
    %v1663 = vpack.c.b16 %v1299, %v1295
    %v1664 = vpack.c.b16 %v1300, %v1296
    %v1665 = vpack.c.b16 %v1301, %v1297
    %v1666 = vpack.c.b16 %v1306, %v1302
    %v1667 = vpack.c.b16 %v1307, %v1303
    %v1668 = vpack.c.b16 %v1308, %v1304
    %v1669 = vpack.c.b16 %v1309, %v1305
    %v1670 = vpack.c.b16 %v1314, %v1310
    %v1671 = vpack.c.b16 %v1315, %v1311
    %v1672 = vpack.c.b16 %v1316, %v1312
    %v1673 = vpack.c.b16 %v1317, %v1313
    %v1674 = vpack.c.b16 %v1322, %v1318
    %v1675 = vpack.c.b16 %v1323, %v1319
    %v1676 = vpack.c.b16 %v1324, %v1320
    %v1677 = vpack.c.b16 %v1325, %v1321
    %v1678 = vpack.c.b16 %v1330, %v1326
    %v1679 = vpack.c.b16 %v1331, %v1327
    %v1680 = vpack.c.b16 %v1332, %v1328
    %v1681 = vpack.c.b16 %v1333, %v1329
    %v1682 = vpack.c.b16 %v1338, %v1334
    %v1683 = vpack.c.b16 %v1339, %v1335
    %v1684 = vpack.c.b16 %v1340, %v1336
    %v1685 = vpack.c.b16 %v1341, %v1337
    %v1686 = vpack.c.b16 %v1346, %v1342
    %v1687 = vpack.c.b16 %v1347, %v1343
    %v1688 = vpack.c.b16 %v1348, %v1344
    %v1689 = vpack.c.b16 %v1349, %v1345
    %v1690 = vpack.c.b16 %v1354, %v1350
    %v1691 = vpack.c.b16 %v1355, %v1351
    %v1692 = vpack.c.b16 %v1356, %v1352
    %v1693 = vpack.c.b16 %v1357, %v1353
    %v1694 = vpack.c.b16 %v1362, %v1358
    %v1695 = vpack.c.b16 %v1363, %v1359
    %v1696 = vpack.c.b16 %v1364, %v1360
    %v1697 = vpack.c.b16 %v1365, %v1361
    %v1698 = vpack.c.b16 %v1370, %v1366
    %v1699 = vpack.c.b16 %v1371, %v1367
    %v1700 = vpack.c.b16 %v1372, %v1368
    %v1701 = vpack.c.b16 %v1373, %v1369
    %v1702 = vpack.c.b16 %v1378, %v1374
    %v1703 = vpack.c.b16 %v1379, %v1375
    %v1704 = vpack.c.b16 %v1380, %v1376
    %v1705 = vpack.c.b16 %v1381, %v1377
    %v1706 = vpack.c.b16 %v1386, %v1382
    %v1707 = vpack.c.b16 %v1387, %v1383
    %v1708 = vpack.c.b16 %v1388, %v1384
    %v1709 = vpack.c.b16 %v1389, %v1385
    %v1710 = vpack.c.b16 %v1394, %v1390
    %v1711 = vpack.c.b16 %v1395, %v1391
    %v1712 = vpack.c.b16 %v1396, %v1392
    %v1713 = vpack.c.b16 %v1397, %v1393
    %v1714 = vpack.c.b16 %v1402, %v1398
    %v1715 = vpack.c.b16 %v1403, %v1399
    %v1716 = vpack.c.b16 %v1404, %v1400
    %v1717 = vpack.c.b16 %v1405, %v1401
    %v1718 = vpack.c.b16 %v1410, %v1406
    %v1719 = vpack.c.b16 %v1411, %v1407
    %v1720 = vpack.c.b16 %v1412, %v1408
    %v1721 = vpack.c.b16 %v1413, %v1409
    %v1722 = vpack.c.b16 %v1418, %v1414
    %v1723 = vpack.c.b16 %v1419, %v1415
    %v1724 = vpack.c.b16 %v1420, %v1416
    %v1725 = vpack.c.b16 %v1421, %v1417
    %v1726 = vpack.c.b16 %v1426, %v1422
    %v1727 = vpack.c.b16 %v1427, %v1423
    %v1728 = vpack.c.b16 %v1428, %v1424
    %v1729 = vpack.c.b16 %v1429, %v1425
    %v1730 = vpack.c.b16 %v1434, %v1430
    %v1731 = vpack.c.b16 %v1435, %v1431
    %v1732 = vpack.c.b16 %v1436, %v1432
    %v1733 = vpack.c.b16 %v1437, %v1433
    %v1734 = vpack.c.b16 %v1442, %v1438
    %v1735 = vpack.c.b16 %v1443, %v1439
    %v1736 = vpack.c.b16 %v1444, %v1440
    %v1737 = vpack.c.b16 %v1445, %v1441
    %v1738 = vpack.c.b16 %v1450, %v1446
    %v1739 = vpack.c.b16 %v1451, %v1447
    %v1740 = vpack.c.b16 %v1452, %v1448
    %v1741 = vpack.c.b16 %v1453, %v1449
    %v1742 = vpack.c.b16 %v1458, %v1454
    %v1743 = vpack.c.b16 %v1459, %v1455
    %v1744 = vpack.c.b16 %v1460, %v1456
    %v1745 = vpack.c.b16 %v1461, %v1457
    %v1746 = vpack.c.b16 %v1466, %v1462
    %v1747 = vpack.c.b16 %v1467, %v1463
    %v1748 = vpack.c.b16 %v1468, %v1464
    %v1749 = vpack.c.b16 %v1469, %v1465
    %v1750 = vpack.c.b16 %v1474, %v1470
    %v1751 = vpack.c.b16 %v1475, %v1471
    %v1752 = vpack.c.b16 %v1476, %v1472
    %v1753 = vpack.c.b16 %v1477, %v1473
    %v1754 = vpack.c.b16 %v1482, %v1478
    %v1755 = vpack.c.b16 %v1483, %v1479
    %v1756 = vpack.c.b16 %v1484, %v1480
    %v1757 = vpack.c.b16 %v1485, %v1481
    %v1758 = vpack.c.b16 %v1490, %v1486
    %v1759 = vpack.c.b16 %v1491, %v1487
    %v1760 = vpack.c.b16 %v1492, %v1488
    %v1761 = vpack.c.b16 %v1493, %v1489
    %v1762 = vpack.c.b16 %v1498, %v1494
    %v1763 = vpack.c.b16 %v1499, %v1495
    %v1764 = vpack.c.b16 %v1500, %v1496
    %v1765 = vpack.c.b16 %v1501, %v1497
    %v1766 = vpack.c.b16 %v1506, %v1502
    %v1767 = vpack.c.b16 %v1507, %v1503
    %v1768 = vpack.c.b16 %v1508, %v1504
    %v1769 = vpack.c.b16 %v1509, %v1505
    %v1770 = vpack.c.b16 %v1514, %v1510
    %v1771 = vpack.c.b16 %v1515, %v1511
    %v1772 = vpack.c.b16 %v1516, %v1512
    %v1773 = vpack.c.b16 %v1517, %v1513
    %2030 = vmatpush.bf16.msra.mxu0 %v1546
    %2031 = vmatpush.bf16.msra.mxu0 %v1542
    %2032 = vmatpush.bf16.msra.mxu0 %v1538
    %2033 = vmatpush.bf16.msra.mxu0 %v1534
    %2034 = vmatpush.bf16.msra.mxu0 %v1530
    %2035 = vmatpush.bf16.msra.mxu0 %v1526
    %2036 = vmatpush.bf16.msra.mxu0 %v1522
    %2037 = vmatpush.bf16.msra.mxu0 %v1518
    %2038 = vmatmul.bf16.gmra.mxu0 %v476
    %v2039 = vpop.f32.mrf.mxu0
    %v2040 = vadd.f32 %v742, %v2039
    %v2041 = vpop.f32.mrf.mxu0
    %v2042 = vadd.f32 %v742, %v2041
    %2043 = vdwg.mxu0
    %2044 = vmatpush.bf16.msra.mxu0 %v1578
    %2045 = vmatpush.bf16.msra.mxu0 %v1574
    %2046 = vmatpush.bf16.msra.mxu0 %v1570
    %2047 = vmatpush.bf16.msra.mxu0 %v1566
    %2048 = vmatpush.bf16.msra.mxu0 %v1562
    %2049 = vmatpush.bf16.msra.mxu0 %v1558
    %2050 = vmatpush.bf16.msra.mxu0 %v1554
    %2051 = vmatpush.bf16.msra.mxu0 %v1550
    %2052 = vmatmul.bf16.gmra.mxu0 %v477
    %v2053 = vpop.f32.mrf.mxu0
    %v2054 = vadd.f32 %v2040, %v2053
    %v2055 = vpop.f32.mrf.mxu0
    %v2056 = vadd.f32 %v2042, %v2055
    %2057 = vdwg.mxu0
    %2058 = vmatpush.bf16.msra.mxu0 %v1610
    %2059 = vmatpush.bf16.msra.mxu0 %v1606
    %2060 = vmatpush.bf16.msra.mxu0 %v1602
    %2061 = vmatpush.bf16.msra.mxu0 %v1598
    %2062 = vmatpush.bf16.msra.mxu0 %v1594
    %2063 = vmatpush.bf16.msra.mxu0 %v1590
    %2064 = vmatpush.bf16.msra.mxu0 %v1586
    %2065 = vmatpush.bf16.msra.mxu0 %v1582
    %2066 = vmatmul.bf16.gmra.mxu0 %v478
    %v2067 = vpop.f32.mrf.mxu0
    %v2068 = vadd.f32 %v2054, %v2067
    %v2069 = vpop.f32.mrf.mxu0
    %v2070 = vadd.f32 %v2056, %v2069
    %2071 = vdwg.mxu0
    %2072 = vmatpush.bf16.msra.mxu0 %v1642
    %2073 = vmatpush.bf16.msra.mxu0 %v1638
    %2074 = vmatpush.bf16.msra.mxu0 %v1634
    %2075 = vmatpush.bf16.msra.mxu0 %v1630
    %2076 = vmatpush.bf16.msra.mxu0 %v1626
    %2077 = vmatpush.bf16.msra.mxu0 %v1622
    %2078 = vmatpush.bf16.msra.mxu0 %v1618
    %2079 = vmatpush.bf16.msra.mxu0 %v1614
    %2080 = vmatmul.bf16.gmra.mxu0 %v479
    %v2081 = vpop.f32.mrf.mxu0
    %v2082 = vadd.f32 %v2068, %v2081
    %v2083 = vpop.f32.mrf.mxu0
    %v2084 = vadd.f32 %v2070, %v2083
    %2085 = vdwg.mxu0
    %2086 = vmatpush.bf16.msra.mxu0 %v1674
    %2087 = vmatpush.bf16.msra.mxu0 %v1670
    %2088 = vmatpush.bf16.msra.mxu0 %v1666
    %2089 = vmatpush.bf16.msra.mxu0 %v1662
    %2090 = vmatpush.bf16.msra.mxu0 %v1658
    %2091 = vmatpush.bf16.msra.mxu0 %v1654
    %2092 = vmatpush.bf16.msra.mxu0 %v1650
    %2093 = vmatpush.bf16.msra.mxu0 %v1646
    %2094 = vmatmul.bf16.gmra.mxu0 %v480
    %v2095 = vpop.f32.mrf.mxu0
    %v2096 = vadd.f32 %v2082, %v2095
    %v2097 = vpop.f32.mrf.mxu0
    %v2098 = vadd.f32 %v2084, %v2097
    %2099 = vdwg.mxu0
    %2100 = vmatpush.bf16.msra.mxu0 %v1706
    %2101 = vmatpush.bf16.msra.mxu0 %v1702
    %2102 = vmatpush.bf16.msra.mxu0 %v1698
    %2103 = vmatpush.bf16.msra.mxu0 %v1694
    %2104 = vmatpush.bf16.msra.mxu0 %v1690
    %2105 = vmatpush.bf16.msra.mxu0 %v1686
    %2106 = vmatpush.bf16.msra.mxu0 %v1682
    %2107 = vmatpush.bf16.msra.mxu0 %v1678
    %2108 = vmatmul.bf16.gmra.mxu0 %v481
    %v2109 = vpop.f32.mrf.mxu0
    %v2110 = vadd.f32 %v2096, %v2109
    %v2111 = vpop.f32.mrf.mxu0
    %v2112 = vadd.f32 %v2098, %v2111
    %2113 = vdwg.mxu0
    %2114 = vmatpush.bf16.msra.mxu0 %v1738
    %2115 = vmatpush.bf16.msra.mxu0 %v1734
    %2116 = vmatpush.bf16.msra.mxu0 %v1730
    %2117 = vmatpush.bf16.msra.mxu0 %v1726
    %2118 = vmatpush.bf16.msra.mxu0 %v1722
    %2119 = vmatpush.bf16.msra.mxu0 %v1718
    %2120 = vmatpush.bf16.msra.mxu0 %v1714
    %2121 = vmatpush.bf16.msra.mxu0 %v1710
    %2122 = vmatmul.bf16.gmra.mxu0 %v482
    %v2123 = vpop.f32.mrf.mxu0
    %v2124 = vadd.f32 %v2110, %v2123
    %v2125 = vpop.f32.mrf.mxu0
    %v2126 = vadd.f32 %v2112, %v2125
    %2127 = vdwg.mxu0
    %2128 = vmatpush.bf16.msra.mxu0 %v1770
    %2129 = vmatpush.bf16.msra.mxu0 %v1766
    %2130 = vmatpush.bf16.msra.mxu0 %v1762
    %2131 = vmatpush.bf16.msra.mxu0 %v1758
    %2132 = vmatpush.bf16.msra.mxu0 %v1754
    %2133 = vmatpush.bf16.msra.mxu0 %v1750
    %2134 = vmatpush.bf16.msra.mxu0 %v1746
    %2135 = vmatpush.bf16.msra.mxu0 %v1742
    %2136 = vmatmul.bf16.gmra.mxu0 %v483
    %v2137 = vpop.f32.mrf.mxu0
    %v2138 = vadd.f32 %v2124, %v2137
    %v2139 = vpop.f32.mrf.mxu0
    %v2140 = vadd.f32 %v2126, %v2139
    %2141 = vdwg.mxu0
    %2142 = vmatpush.bf16.msra.mxu0 %v1547
    %2143 = vmatpush.bf16.msra.mxu0 %v1543
    %2144 = vmatpush.bf16.msra.mxu0 %v1539
    %2145 = vmatpush.bf16.msra.mxu0 %v1535
    %2146 = vmatpush.bf16.msra.mxu0 %v1531
    %2147 = vmatpush.bf16.msra.mxu0 %v1527
    %2148 = vmatpush.bf16.msra.mxu0 %v1523
    %2149 = vmatpush.bf16.msra.mxu0 %v1519
    %2150 = vmatmul.bf16.gmra.mxu0 %v476
    %v2151 = vpop.f32.mrf.mxu0
    %v2152 = vadd.f32 %v743, %v2151
    %v2153 = vpop.f32.mrf.mxu0
    %v2154 = vadd.f32 %v743, %v2153
    %2155 = vdwg.mxu0
    %2156 = vmatpush.bf16.msra.mxu0 %v1579
    %2157 = vmatpush.bf16.msra.mxu0 %v1575
    %2158 = vmatpush.bf16.msra.mxu0 %v1571
    %2159 = vmatpush.bf16.msra.mxu0 %v1567
    %2160 = vmatpush.bf16.msra.mxu0 %v1563
    %2161 = vmatpush.bf16.msra.mxu0 %v1559
    %2162 = vmatpush.bf16.msra.mxu0 %v1555
    %2163 = vmatpush.bf16.msra.mxu0 %v1551
    %2164 = vmatmul.bf16.gmra.mxu0 %v477
    %v2165 = vpop.f32.mrf.mxu0
    %v2166 = vadd.f32 %v2152, %v2165
    %v2167 = vpop.f32.mrf.mxu0
    %v2168 = vadd.f32 %v2154, %v2167
    %2169 = vdwg.mxu0
    %2170 = vmatpush.bf16.msra.mxu0 %v1611
    %2171 = vmatpush.bf16.msra.mxu0 %v1607
    %2172 = vmatpush.bf16.msra.mxu0 %v1603
    %2173 = vmatpush.bf16.msra.mxu0 %v1599
    %2174 = vmatpush.bf16.msra.mxu0 %v1595
    %2175 = vmatpush.bf16.msra.mxu0 %v1591
    %2176 = vmatpush.bf16.msra.mxu0 %v1587
    %2177 = vmatpush.bf16.msra.mxu0 %v1583
    %2178 = vmatmul.bf16.gmra.mxu0 %v478
    %v2179 = vpop.f32.mrf.mxu0
    %v2180 = vadd.f32 %v2166, %v2179
    %v2181 = vpop.f32.mrf.mxu0
    %v2182 = vadd.f32 %v2168, %v2181
    %2183 = vdwg.mxu0
    %2184 = vmatpush.bf16.msra.mxu0 %v1643
    %2185 = vmatpush.bf16.msra.mxu0 %v1639
    %2186 = vmatpush.bf16.msra.mxu0 %v1635
    %2187 = vmatpush.bf16.msra.mxu0 %v1631
    %2188 = vmatpush.bf16.msra.mxu0 %v1627
    %2189 = vmatpush.bf16.msra.mxu0 %v1623
    %2190 = vmatpush.bf16.msra.mxu0 %v1619
    %2191 = vmatpush.bf16.msra.mxu0 %v1615
    %2192 = vmatmul.bf16.gmra.mxu0 %v479
    %v2193 = vpop.f32.mrf.mxu0
    %v2194 = vadd.f32 %v2180, %v2193
    %v2195 = vpop.f32.mrf.mxu0
    %v2196 = vadd.f32 %v2182, %v2195
    %2197 = vdwg.mxu0
    %2198 = vmatpush.bf16.msra.mxu0 %v1675
    %2199 = vmatpush.bf16.msra.mxu0 %v1671
    %2200 = vmatpush.bf16.msra.mxu0 %v1667
    %2201 = vmatpush.bf16.msra.mxu0 %v1663
    %2202 = vmatpush.bf16.msra.mxu0 %v1659
    %2203 = vmatpush.bf16.msra.mxu0 %v1655
    %2204 = vmatpush.bf16.msra.mxu0 %v1651
    %2205 = vmatpush.bf16.msra.mxu0 %v1647
    %2206 = vmatmul.bf16.gmra.mxu0 %v480
    %v2207 = vpop.f32.mrf.mxu0
    %v2208 = vadd.f32 %v2194, %v2207
    %v2209 = vpop.f32.mrf.mxu0
    %v2210 = vadd.f32 %v2196, %v2209
    %2211 = vdwg.mxu0
    %2212 = vmatpush.bf16.msra.mxu0 %v1707
    %2213 = vmatpush.bf16.msra.mxu0 %v1703
    %2214 = vmatpush.bf16.msra.mxu0 %v1699
    %2215 = vmatpush.bf16.msra.mxu0 %v1695
    %2216 = vmatpush.bf16.msra.mxu0 %v1691
    %2217 = vmatpush.bf16.msra.mxu0 %v1687
    %2218 = vmatpush.bf16.msra.mxu0 %v1683
    %2219 = vmatpush.bf16.msra.mxu0 %v1679
    %2220 = vmatmul.bf16.gmra.mxu0 %v481
    %v2221 = vpop.f32.mrf.mxu0
    %v2222 = vadd.f32 %v2208, %v2221
    %v2223 = vpop.f32.mrf.mxu0
    %v2224 = vadd.f32 %v2210, %v2223
    %2225 = vdwg.mxu0
    %2226 = vmatpush.bf16.msra.mxu0 %v1739
    %2227 = vmatpush.bf16.msra.mxu0 %v1735
    %2228 = vmatpush.bf16.msra.mxu0 %v1731
    %2229 = vmatpush.bf16.msra.mxu0 %v1727
    %2230 = vmatpush.bf16.msra.mxu0 %v1723
    %2231 = vmatpush.bf16.msra.mxu0 %v1719
    %2232 = vmatpush.bf16.msra.mxu0 %v1715
    %2233 = vmatpush.bf16.msra.mxu0 %v1711
    %2234 = vmatmul.bf16.gmra.mxu0 %v482
    %v2235 = vpop.f32.mrf.mxu0
    %v2236 = vadd.f32 %v2222, %v2235
    %v2237 = vpop.f32.mrf.mxu0
    %v2238 = vadd.f32 %v2224, %v2237
    %2239 = vdwg.mxu0
    %2240 = vmatpush.bf16.msra.mxu0 %v1771
    %2241 = vmatpush.bf16.msra.mxu0 %v1767
    %2242 = vmatpush.bf16.msra.mxu0 %v1763
    %2243 = vmatpush.bf16.msra.mxu0 %v1759
    %2244 = vmatpush.bf16.msra.mxu0 %v1755
    %2245 = vmatpush.bf16.msra.mxu0 %v1751
    %2246 = vmatpush.bf16.msra.mxu0 %v1747
    %2247 = vmatpush.bf16.msra.mxu0 %v1743
    %2248 = vmatmul.bf16.gmra.mxu0 %v483
    %v2249 = vpop.f32.mrf.mxu0
    %v2250 = vadd.f32 %v2236, %v2249
    %v2251 = vpop.f32.mrf.mxu0
    %v2252 = vadd.f32 %v2238, %v2251
    %2253 = vdwg.mxu0
    %2254 = vmatpush.bf16.msra.mxu0 %v1548
    %2255 = vmatpush.bf16.msra.mxu0 %v1544
    %2256 = vmatpush.bf16.msra.mxu0 %v1540
    %2257 = vmatpush.bf16.msra.mxu0 %v1536
    %2258 = vmatpush.bf16.msra.mxu0 %v1532
    %2259 = vmatpush.bf16.msra.mxu0 %v1528
    %2260 = vmatpush.bf16.msra.mxu0 %v1524
    %2261 = vmatpush.bf16.msra.mxu0 %v1520
    %2262 = vmatmul.bf16.gmra.mxu0 %v476
    %v2263 = vpop.f32.mrf.mxu0
    %v2264 = vadd.f32 %v744, %v2263
    %v2265 = vpop.f32.mrf.mxu0
    %v2266 = vadd.f32 %v744, %v2265
    %2267 = vdwg.mxu0
    %2268 = vmatpush.bf16.msra.mxu0 %v1580
    %2269 = vmatpush.bf16.msra.mxu0 %v1576
    %2270 = vmatpush.bf16.msra.mxu0 %v1572
    %2271 = vmatpush.bf16.msra.mxu0 %v1568
    %2272 = vmatpush.bf16.msra.mxu0 %v1564
    %2273 = vmatpush.bf16.msra.mxu0 %v1560
    %2274 = vmatpush.bf16.msra.mxu0 %v1556
    %2275 = vmatpush.bf16.msra.mxu0 %v1552
    %2276 = vmatmul.bf16.gmra.mxu0 %v477
    %v2277 = vpop.f32.mrf.mxu0
    %v2278 = vadd.f32 %v2264, %v2277
    %v2279 = vpop.f32.mrf.mxu0
    %v2280 = vadd.f32 %v2266, %v2279
    %2281 = vdwg.mxu0
    %2282 = vmatpush.bf16.msra.mxu0 %v1612
    %2283 = vmatpush.bf16.msra.mxu0 %v1608
    %2284 = vmatpush.bf16.msra.mxu0 %v1604
    %2285 = vmatpush.bf16.msra.mxu0 %v1600
    %2286 = vmatpush.bf16.msra.mxu0 %v1596
    %2287 = vmatpush.bf16.msra.mxu0 %v1592
    %2288 = vmatpush.bf16.msra.mxu0 %v1588
    %2289 = vmatpush.bf16.msra.mxu0 %v1584
    %2290 = vmatmul.bf16.gmra.mxu0 %v478
    %v2291 = vpop.f32.mrf.mxu0
    %v2292 = vadd.f32 %v2278, %v2291
    %v2293 = vpop.f32.mrf.mxu0
    %v2294 = vadd.f32 %v2280, %v2293
    %2295 = vdwg.mxu0
    %2296 = vmatpush.bf16.msra.mxu0 %v1644
    %2297 = vmatpush.bf16.msra.mxu0 %v1640
    %2298 = vmatpush.bf16.msra.mxu0 %v1636
    %2299 = vmatpush.bf16.msra.mxu0 %v1632
    %2300 = vmatpush.bf16.msra.mxu0 %v1628
    %2301 = vmatpush.bf16.msra.mxu0 %v1624
    %2302 = vmatpush.bf16.msra.mxu0 %v1620
    %2303 = vmatpush.bf16.msra.mxu0 %v1616
    %2304 = vmatmul.bf16.gmra.mxu0 %v479
    %v2305 = vpop.f32.mrf.mxu0
    %v2306 = vadd.f32 %v2292, %v2305
    %v2307 = vpop.f32.mrf.mxu0
    %v2308 = vadd.f32 %v2294, %v2307
    %2309 = vdwg.mxu0
    %2310 = vmatpush.bf16.msra.mxu0 %v1676
    %2311 = vmatpush.bf16.msra.mxu0 %v1672
    %2312 = vmatpush.bf16.msra.mxu0 %v1668
    %2313 = vmatpush.bf16.msra.mxu0 %v1664
    %2314 = vmatpush.bf16.msra.mxu0 %v1660
    %2315 = vmatpush.bf16.msra.mxu0 %v1656
    %2316 = vmatpush.bf16.msra.mxu0 %v1652
    %2317 = vmatpush.bf16.msra.mxu0 %v1648
    %2318 = vmatmul.bf16.gmra.mxu0 %v480
    %v2319 = vpop.f32.mrf.mxu0
    %v2320 = vadd.f32 %v2306, %v2319
    %v2321 = vpop.f32.mrf.mxu0
    %v2322 = vadd.f32 %v2308, %v2321
    %2323 = vdwg.mxu0
    %2324 = vmatpush.bf16.msra.mxu0 %v1708
    %2325 = vmatpush.bf16.msra.mxu0 %v1704
    %2326 = vmatpush.bf16.msra.mxu0 %v1700
    %2327 = vmatpush.bf16.msra.mxu0 %v1696
    %2328 = vmatpush.bf16.msra.mxu0 %v1692
    %2329 = vmatpush.bf16.msra.mxu0 %v1688
    %2330 = vmatpush.bf16.msra.mxu0 %v1684
    %2331 = vmatpush.bf16.msra.mxu0 %v1680
    %2332 = vmatmul.bf16.gmra.mxu0 %v481
    %v2333 = vpop.f32.mrf.mxu0
    %v2334 = vadd.f32 %v2320, %v2333
    %v2335 = vpop.f32.mrf.mxu0
    %v2336 = vadd.f32 %v2322, %v2335
    %2337 = vdwg.mxu0
    %2338 = vmatpush.bf16.msra.mxu0 %v1740
    %2339 = vmatpush.bf16.msra.mxu0 %v1736
    %2340 = vmatpush.bf16.msra.mxu0 %v1732
    %2341 = vmatpush.bf16.msra.mxu0 %v1728
    %2342 = vmatpush.bf16.msra.mxu0 %v1724
    %2343 = vmatpush.bf16.msra.mxu0 %v1720
    %2344 = vmatpush.bf16.msra.mxu0 %v1716
    %2345 = vmatpush.bf16.msra.mxu0 %v1712
    %2346 = vmatmul.bf16.gmra.mxu0 %v482
    %v2347 = vpop.f32.mrf.mxu0
    %v2348 = vadd.f32 %v2334, %v2347
    %v2349 = vpop.f32.mrf.mxu0
    %v2350 = vadd.f32 %v2336, %v2349
    %2351 = vdwg.mxu0
    %2352 = vmatpush.bf16.msra.mxu0 %v1772
    %2353 = vmatpush.bf16.msra.mxu0 %v1768
    %2354 = vmatpush.bf16.msra.mxu0 %v1764
    %2355 = vmatpush.bf16.msra.mxu0 %v1760
    %2356 = vmatpush.bf16.msra.mxu0 %v1756
    %2357 = vmatpush.bf16.msra.mxu0 %v1752
    %2358 = vmatpush.bf16.msra.mxu0 %v1748
    %2359 = vmatpush.bf16.msra.mxu0 %v1744
    %2360 = vmatmul.bf16.gmra.mxu0 %v483
    %v2361 = vpop.f32.mrf.mxu0
    %v2362 = vadd.f32 %v2348, %v2361
    %v2363 = vpop.f32.mrf.mxu0
    %v2364 = vadd.f32 %v2350, %v2363
    %2365 = vdwg.mxu0
    %2366 = vmatpush.bf16.msra.mxu0 %v1549
    %2367 = vmatpush.bf16.msra.mxu0 %v1545
    %2368 = vmatpush.bf16.msra.mxu0 %v1541
    %2369 = vmatpush.bf16.msra.mxu0 %v1537
    %2370 = vmatpush.bf16.msra.mxu0 %v1533
    %2371 = vmatpush.bf16.msra.mxu0 %v1529
    %2372 = vmatpush.bf16.msra.mxu0 %v1525
    %2373 = vmatpush.bf16.msra.mxu0 %v1521
    %2374 = vmatmul.bf16.gmra.mxu0 %v476
    %v2375 = vpop.f32.mrf.mxu0
    %v2376 = vadd.f32 %v745, %v2375
    %v2377 = vpop.f32.mrf.mxu0
    %v2378 = vadd.f32 %v745, %v2377
    %2379 = vdwg.mxu0
    %2380 = vmatpush.bf16.msra.mxu0 %v1581
    %2381 = vmatpush.bf16.msra.mxu0 %v1577
    %2382 = vmatpush.bf16.msra.mxu0 %v1573
    %2383 = vmatpush.bf16.msra.mxu0 %v1569
    %2384 = vmatpush.bf16.msra.mxu0 %v1565
    %2385 = vmatpush.bf16.msra.mxu0 %v1561
    %2386 = vmatpush.bf16.msra.mxu0 %v1557
    %2387 = vmatpush.bf16.msra.mxu0 %v1553
    %2388 = vmatmul.bf16.gmra.mxu0 %v477
    %v2389 = vpop.f32.mrf.mxu0
    %v2390 = vadd.f32 %v2376, %v2389
    %v2391 = vpop.f32.mrf.mxu0
    %v2392 = vadd.f32 %v2378, %v2391
    %2393 = vdwg.mxu0
    %2394 = vmatpush.bf16.msra.mxu0 %v1613
    %2395 = vmatpush.bf16.msra.mxu0 %v1609
    %2396 = vmatpush.bf16.msra.mxu0 %v1605
    %2397 = vmatpush.bf16.msra.mxu0 %v1601
    %2398 = vmatpush.bf16.msra.mxu0 %v1597
    %2399 = vmatpush.bf16.msra.mxu0 %v1593
    %2400 = vmatpush.bf16.msra.mxu0 %v1589
    %2401 = vmatpush.bf16.msra.mxu0 %v1585
    %2402 = vmatmul.bf16.gmra.mxu0 %v478
    %v2403 = vpop.f32.mrf.mxu0
    %v2404 = vadd.f32 %v2390, %v2403
    %v2405 = vpop.f32.mrf.mxu0
    %v2406 = vadd.f32 %v2392, %v2405
    %2407 = vdwg.mxu0
    %2408 = vmatpush.bf16.msra.mxu0 %v1645
    %2409 = vmatpush.bf16.msra.mxu0 %v1641
    %2410 = vmatpush.bf16.msra.mxu0 %v1637
    %2411 = vmatpush.bf16.msra.mxu0 %v1633
    %2412 = vmatpush.bf16.msra.mxu0 %v1629
    %2413 = vmatpush.bf16.msra.mxu0 %v1625
    %2414 = vmatpush.bf16.msra.mxu0 %v1621
    %2415 = vmatpush.bf16.msra.mxu0 %v1617
    %2416 = vmatmul.bf16.gmra.mxu0 %v479
    %v2417 = vpop.f32.mrf.mxu0
    %v2418 = vadd.f32 %v2404, %v2417
    %v2419 = vpop.f32.mrf.mxu0
    %v2420 = vadd.f32 %v2406, %v2419
    %2421 = vdwg.mxu0
    %2422 = vmatpush.bf16.msra.mxu0 %v1677
    %2423 = vmatpush.bf16.msra.mxu0 %v1673
    %2424 = vmatpush.bf16.msra.mxu0 %v1669
    %2425 = vmatpush.bf16.msra.mxu0 %v1665
    %2426 = vmatpush.bf16.msra.mxu0 %v1661
    %2427 = vmatpush.bf16.msra.mxu0 %v1657
    %2428 = vmatpush.bf16.msra.mxu0 %v1653
    %2429 = vmatpush.bf16.msra.mxu0 %v1649
    %2430 = vmatmul.bf16.gmra.mxu0 %v480
    %v2431 = vpop.f32.mrf.mxu0
    %v2432 = vadd.f32 %v2418, %v2431
    %v2433 = vpop.f32.mrf.mxu0
    %v2434 = vadd.f32 %v2420, %v2433
    %2435 = vdwg.mxu0
    %2436 = vmatpush.bf16.msra.mxu0 %v1709
    %2437 = vmatpush.bf16.msra.mxu0 %v1705
    %2438 = vmatpush.bf16.msra.mxu0 %v1701
    %2439 = vmatpush.bf16.msra.mxu0 %v1697
    %2440 = vmatpush.bf16.msra.mxu0 %v1693
    %2441 = vmatpush.bf16.msra.mxu0 %v1689
    %2442 = vmatpush.bf16.msra.mxu0 %v1685
    %2443 = vmatpush.bf16.msra.mxu0 %v1681
    %2444 = vmatmul.bf16.gmra.mxu0 %v481
    %v2445 = vpop.f32.mrf.mxu0
    %v2446 = vadd.f32 %v2432, %v2445
    %v2447 = vpop.f32.mrf.mxu0
    %v2448 = vadd.f32 %v2434, %v2447
    %2449 = vdwg.mxu0
    %2450 = vmatpush.bf16.msra.mxu0 %v1741
    %2451 = vmatpush.bf16.msra.mxu0 %v1737
    %2452 = vmatpush.bf16.msra.mxu0 %v1733
    %2453 = vmatpush.bf16.msra.mxu0 %v1729
    %2454 = vmatpush.bf16.msra.mxu0 %v1725
    %2455 = vmatpush.bf16.msra.mxu0 %v1721
    %2456 = vmatpush.bf16.msra.mxu0 %v1717
    %2457 = vmatpush.bf16.msra.mxu0 %v1713
    %2458 = vmatmul.bf16.gmra.mxu0 %v482
    %v2459 = vpop.f32.mrf.mxu0
    %v2460 = vadd.f32 %v2446, %v2459
    %v2461 = vpop.f32.mrf.mxu0
    %v2462 = vadd.f32 %v2448, %v2461
    %2463 = vdwg.mxu0
    %2464 = vmatpush.bf16.msra.mxu0 %v1773
    %2465 = vmatpush.bf16.msra.mxu0 %v1769
    %2466 = vmatpush.bf16.msra.mxu0 %v1765
    %2467 = vmatpush.bf16.msra.mxu0 %v1761
    %2468 = vmatpush.bf16.msra.mxu0 %v1757
    %2469 = vmatpush.bf16.msra.mxu0 %v1753
    %2470 = vmatpush.bf16.msra.mxu0 %v1749
    %2471 = vmatpush.bf16.msra.mxu0 %v1745
    %2472 = vmatmul.bf16.gmra.mxu0 %v483
    %v2473 = vpop.f32.mrf.mxu0
    %v2474 = vadd.f32 %v2460, %v2473
    %v2475 = vpop.f32.mrf.mxu0
    %v2476 = vadd.f32 %v2462, %v2475
    %2477 = vdwg.mxu0
    %v2478 = vmax.f32 %v2138, 0.0
    %v2479 = vmax.f32 %v2250, 0.0
    %v2480 = vmax.f32 %v2362, 0.0
    %v2481 = vmax.f32 %v2474, 0.0
    %v2482 = vmax.f32 %v2140, 0.0
    %v2483 = vmax.f32 %v2252, 0.0
    %v2484 = vmax.f32 %v2364, 0.0
    %v2485 = vmax.f32 %v2476, 0.0
    %v2486 = vpack.c.bf16 %v2482, %v2478
    %v2487 = vpack.c.bf16 %v2483, %v2479
    %v2488 = vpack.c.bf16 %v2484, %v2480
    %v2489 = vpack.c.bf16 %v2485, %v2481
    %v2490 = vld [vmem:[#allocation10] sm:$0xf]
    %v2491 = vld [vmem:[#allocation10 + $0x4] sm:$0xf]
    %v2492 = vld [vmem:[#allocation10 + $0x8] sm:$0xf]
    %v2493 = vld [vmem:[#allocation10 + $0xc] sm:$0xf]
    %v2494 = vld [vmem:[#allocation10 + $0x10] sm:$0xf]
    %v2495 = vld [vmem:[#allocation10 + $0x14] sm:$0xf]
    %v2496 = vld [vmem:[#allocation10 + $0x18] sm:$0xf]
    %v2497 = vld [vmem:[#allocation10 + $0x1c] sm:$0xf]
    %v2498 = vld [vmem:[#allocation10 + $0x20] sm:$0xf]
    %v2499 = vld [vmem:[#allocation10 + $0x24] sm:$0xf]
    %v2500 = vld [vmem:[#allocation10 + $0x28] sm:$0xf]
    %v2501 = vld [vmem:[#allocation10 + $0x2c] sm:$0xf]
    %v2502 = vld [vmem:[#allocation10 + $0x30] sm:$0xf]
    %v2503 = vld [vmem:[#allocation10 + $0x34] sm:$0xf]
    %v2504 = vld [vmem:[#allocation10 + $0x38] sm:$0xf]
    %v2505 = vld [vmem:[#allocation10 + $0x3c] sm:$0xf]
    %v2506 = vld [vmem:[#allocation10 + $0x40] sm:$0xf]
    %v2507 = vld [vmem:[#allocation10 + $0x44] sm:$0xf]
    %v2508 = vld [vmem:[#allocation10 + $0x48] sm:$0xf]
    %v2509 = vld [vmem:[#allocation10 + $0x4c] sm:$0xf]
    %v2510 = vld [vmem:[#allocation10 + $0x50] sm:$0xf]
    %v2511 = vld [vmem:[#allocation10 + $0x54] sm:$0xf]
    %v2512 = vld [vmem:[#allocation10 + $0x58] sm:$0xf]
    %v2513 = vld [vmem:[#allocation10 + $0x5c] sm:$0xf]
    %v2514 = vld [vmem:[#allocation10 + $0x60] sm:$0xf]
    %v2515 = vld [vmem:[#allocation10 + $0x64] sm:$0xf]
    %v2516 = vld [vmem:[#allocation10 + $0x68] sm:$0xf]
    %v2517 = vld [vmem:[#allocation10 + $0x6c] sm:$0xf]
    %v2518 = vld [vmem:[#allocation10 + $0x70] sm:$0xf]
    %v2519 = vld [vmem:[#allocation10 + $0x74] sm:$0xf]
    %v2520 = vld [vmem:[#allocation10 + $0x78] sm:$0xf]
    %v2521 = vld [vmem:[#allocation10 + $0x7c] sm:$0xf]
    %v2522 = vld [vmem:[#allocation10 + $0x80] sm:$0xf]
    %v2523 = vld [vmem:[#allocation10 + $0x84] sm:$0xf]
    %v2524 = vld [vmem:[#allocation10 + $0x88] sm:$0xf]
    %v2525 = vld [vmem:[#allocation10 + $0x8c] sm:$0xf]
    %v2526 = vld [vmem:[#allocation10 + $0x90] sm:$0xf]
    %v2527 = vld [vmem:[#allocation10 + $0x94] sm:$0xf]
    %v2528 = vld [vmem:[#allocation10 + $0x98] sm:$0xf]
    %v2529 = vld [vmem:[#allocation10 + $0x9c] sm:$0xf]
    %v2530 = vld [vmem:[#allocation10 + $0xa0] sm:$0xf]
    %v2531 = vld [vmem:[#allocation10 + $0xa4] sm:$0xf]
    %v2532 = vld [vmem:[#allocation10 + $0xa8] sm:$0xf]
    %v2533 = vld [vmem:[#allocation10 + $0xac] sm:$0xf]
    %v2534 = vld [vmem:[#allocation10 + $0xb0] sm:$0xf]
    %v2535 = vld [vmem:[#allocation10 + $0xb4] sm:$0xf]
    %v2536 = vld [vmem:[#allocation10 + $0xb8] sm:$0xf]
    %v2537 = vld [vmem:[#allocation10 + $0xbc] sm:$0xf]
    %v2538 = vld [vmem:[#allocation10 + $0xc0] sm:$0xf]
    %v2539 = vld [vmem:[#allocation10 + $0xc4] sm:$0xf]
    %v2540 = vld [vmem:[#allocation10 + $0xc8] sm:$0xf]
    %v2541 = vld [vmem:[#allocation10 + $0xcc] sm:$0xf]
    %v2542 = vld [vmem:[#allocation10 + $0xd0] sm:$0xf]
    %v2543 = vld [vmem:[#allocation10 + $0xd4] sm:$0xf]
    %v2544 = vld [vmem:[#allocation10 + $0xd8] sm:$0xf]
    %v2545 = vld [vmem:[#allocation10 + $0xdc] sm:$0xf]
    %v2546 = vld [vmem:[#allocation10 + $0xe0] sm:$0xf]
    %v2547 = vld [vmem:[#allocation10 + $0xe4] sm:$0xf]
    %v2548 = vld [vmem:[#allocation10 + $0xe8] sm:$0xf]
    %v2549 = vld [vmem:[#allocation10 + $0xec] sm:$0xf]
    %v2550 = vld [vmem:[#allocation10 + $0xf0] sm:$0xf]
    %v2551 = vld [vmem:[#allocation10 + $0xf4] sm:$0xf]
    %v2552 = vld [vmem:[#allocation10 + $0xf8] sm:$0xf]
    %v2553 = vld [vmem:[#allocation10 + $0xfc] sm:$0xf]
    %v2554 = vld [vmem:[%s8] sm:$0x1]
    %v2556 = vperm.slane %v2554, 0
    %v2622 = vunpack.c.l.b16 %v2490
    %v2623 = vunpack.c.l.b16 %v2491
    %v2624 = vunpack.c.l.b16 %v2492
    %v2625 = vunpack.c.l.b16 %v2493
    %v2626 = vunpack.c.l.b16 %v2494
    %v2627 = vunpack.c.l.b16 %v2495
    %v2628 = vunpack.c.l.b16 %v2496
    %v2629 = vunpack.c.l.b16 %v2497
    %v2630 = vunpack.c.l.b16 %v2498
    %v2631 = vunpack.c.l.b16 %v2499
    %v2632 = vunpack.c.l.b16 %v2500
    %v2633 = vunpack.c.l.b16 %v2501
    %v2634 = vunpack.c.l.b16 %v2502
    %v2635 = vunpack.c.l.b16 %v2503
    %v2636 = vunpack.c.l.b16 %v2504
    %v2637 = vunpack.c.l.b16 %v2505
    %v2638 = vunpack.c.l.b16 %v2506
    %v2639 = vunpack.c.l.b16 %v2507
    %v2640 = vunpack.c.l.b16 %v2508
    %v2641 = vunpack.c.l.b16 %v2509
    %v2642 = vunpack.c.l.b16 %v2510
    %v2643 = vunpack.c.l.b16 %v2511
    %v2644 = vunpack.c.l.b16 %v2512
    %v2645 = vunpack.c.l.b16 %v2513
    %v2646 = vunpack.c.l.b16 %v2514
    %v2647 = vunpack.c.l.b16 %v2515
    %v2648 = vunpack.c.l.b16 %v2516
    %v2649 = vunpack.c.l.b16 %v2517
    %v2650 = vunpack.c.l.b16 %v2518
    %v2651 = vunpack.c.l.b16 %v2519
    %v2652 = vunpack.c.l.b16 %v2520
    %v2653 = vunpack.c.l.b16 %v2521
    %v2654 = vunpack.c.l.b16 %v2522
    %v2655 = vunpack.c.l.b16 %v2523
    %v2656 = vunpack.c.l.b16 %v2524
    %v2657 = vunpack.c.l.b16 %v2525
    %v2658 = vunpack.c.l.b16 %v2526
    %v2659 = vunpack.c.l.b16 %v2527
    %v2660 = vunpack.c.l.b16 %v2528
    %v2661 = vunpack.c.l.b16 %v2529
    %v2662 = vunpack.c.l.b16 %v2530
    %v2663 = vunpack.c.l.b16 %v2531
    %v2664 = vunpack.c.l.b16 %v2532
    %v2665 = vunpack.c.l.b16 %v2533
    %v2666 = vunpack.c.l.b16 %v2534
    %v2667 = vunpack.c.l.b16 %v2535
    %v2668 = vunpack.c.l.b16 %v2536
    %v2669 = vunpack.c.l.b16 %v2537
    %v2670 = vunpack.c.l.b16 %v2538
    %v2671 = vunpack.c.l.b16 %v2539
    %v2672 = vunpack.c.l.b16 %v2540
    %v2673 = vunpack.c.l.b16 %v2541
    %v2674 = vunpack.c.l.b16 %v2542
    %v2675 = vunpack.c.l.b16 %v2543
    %v2676 = vunpack.c.l.b16 %v2544
    %v2677 = vunpack.c.l.b16 %v2545
    %v2678 = vunpack.c.l.b16 %v2546
    %v2679 = vunpack.c.l.b16 %v2547
    %v2680 = vunpack.c.l.b16 %v2548
    %v2681 = vunpack.c.l.b16 %v2549
    %v2682 = vunpack.c.l.b16 %v2550
    %v2683 = vunpack.c.l.b16 %v2551
    %v2684 = vunpack.c.l.b16 %v2552
    %v2685 = vunpack.c.l.b16 %v2553
    %v2686 = vpack.c.b16 %v2623, %v2622
    %v2687 = vpack.c.b16 %v2625, %v2624
    %v2688 = vpack.c.b16 %v2627, %v2626
    %v2689 = vpack.c.b16 %v2629, %v2628
    %v2690 = vpack.c.b16 %v2631, %v2630
    %v2691 = vpack.c.b16 %v2633, %v2632
    %v2692 = vpack.c.b16 %v2635, %v2634
    %v2693 = vpack.c.b16 %v2637, %v2636
    %v2694 = vpack.c.b16 %v2639, %v2638
    %v2695 = vpack.c.b16 %v2641, %v2640
    %v2696 = vpack.c.b16 %v2643, %v2642
    %v2697 = vpack.c.b16 %v2645, %v2644
    %v2698 = vpack.c.b16 %v2647, %v2646
    %v2699 = vpack.c.b16 %v2649, %v2648
    %v2700 = vpack.c.b16 %v2651, %v2650
    %v2701 = vpack.c.b16 %v2653, %v2652
    %v2702 = vpack.c.b16 %v2655, %v2654
    %v2703 = vpack.c.b16 %v2657, %v2656
    %v2704 = vpack.c.b16 %v2659, %v2658
    %v2705 = vpack.c.b16 %v2661, %v2660
    %v2706 = vpack.c.b16 %v2663, %v2662
    %v2707 = vpack.c.b16 %v2665, %v2664
    %v2708 = vpack.c.b16 %v2667, %v2666
    %v2709 = vpack.c.b16 %v2669, %v2668
    %v2710 = vpack.c.b16 %v2671, %v2670
    %v2711 = vpack.c.b16 %v2673, %v2672
    %v2712 = vpack.c.b16 %v2675, %v2674
    %v2713 = vpack.c.b16 %v2677, %v2676
    %v2714 = vpack.c.b16 %v2679, %v2678
    %v2715 = vpack.c.b16 %v2681, %v2680
    %v2716 = vpack.c.b16 %v2683, %v2682
    %v2717 = vpack.c.b16 %v2685, %v2684
    %2750 = vmatpush.bf16.msra.mxu0 %v2693
    %2751 = vmatpush.bf16.msra.mxu0 %v2692
    %2752 = vmatpush.bf16.msra.mxu0 %v2691
    %2753 = vmatpush.bf16.msra.mxu0 %v2690
    %2754 = vmatpush.bf16.msra.mxu0 %v2689
    %2755 = vmatpush.bf16.msra.mxu0 %v2688
    %2756 = vmatpush.bf16.msra.mxu0 %v2687
    %2757 = vmatpush.bf16.msra.mxu0 %v2686
    %2758 = vmatmul.bf16.gmra.mxu0 %v2486
    %v2759 = vpop.f32.mrf.mxu0
    %v2760 = vadd.f32 %v2556, %v2759
    %v2761 = vpop.f32.mrf.mxu0
    %v2762 = vadd.f32 %v2556, %v2761
    %2763 = vdwg.mxu0
    %2764 = vmatpush.bf16.msra.mxu0 %v2701
    %2765 = vmatpush.bf16.msra.mxu0 %v2700
    %2766 = vmatpush.bf16.msra.mxu0 %v2699
    %2767 = vmatpush.bf16.msra.mxu0 %v2698
    %2768 = vmatpush.bf16.msra.mxu0 %v2697
    %2769 = vmatpush.bf16.msra.mxu0 %v2696
    %2770 = vmatpush.bf16.msra.mxu0 %v2695
    %2771 = vmatpush.bf16.msra.mxu0 %v2694
    %2772 = vmatmul.bf16.gmra.mxu0 %v2487
    %v2773 = vpop.f32.mrf.mxu0
    %v2774 = vadd.f32 %v2760, %v2773
    %v2775 = vpop.f32.mrf.mxu0
    %v2776 = vadd.f32 %v2762, %v2775
    %2777 = vdwg.mxu0
    %2778 = vmatpush.bf16.msra.mxu0 %v2709
    %2779 = vmatpush.bf16.msra.mxu0 %v2708
    %2780 = vmatpush.bf16.msra.mxu0 %v2707
    %2781 = vmatpush.bf16.msra.mxu0 %v2706
    %2782 = vmatpush.bf16.msra.mxu0 %v2705
    %2783 = vmatpush.bf16.msra.mxu0 %v2704
    %2784 = vmatpush.bf16.msra.mxu0 %v2703
    %2785 = vmatpush.bf16.msra.mxu0 %v2702
    %2786 = vmatmul.bf16.gmra.mxu0 %v2488
    %v2787 = vpop.f32.mrf.mxu0
    %v2788 = vadd.f32 %v2774, %v2787
    %v2789 = vpop.f32.mrf.mxu0
    %v2790 = vadd.f32 %v2776, %v2789
    %2791 = vdwg.mxu0
    %2792 = vmatpush.bf16.msra.mxu0 %v2717
    %2793 = vmatpush.bf16.msra.mxu0 %v2716
    %2794 = vmatpush.bf16.msra.mxu0 %v2715
    %2795 = vmatpush.bf16.msra.mxu0 %v2714
    %2796 = vmatpush.bf16.msra.mxu0 %v2713
    %2797 = vmatpush.bf16.msra.mxu0 %v2712
    %2798 = vmatpush.bf16.msra.mxu0 %v2711
    %2799 = vmatpush.bf16.msra.mxu0 %v2710
    %2800 = vmatmul.bf16.gmra.mxu0 %v2489
    %v2801 = vpop.f32.mrf.mxu0
    %v2802 = vadd.f32 %v2788, %v2801
    %v2803 = vpop.f32.mrf.mxu0
    %v2804 = vadd.f32 %v2790, %v2803
    %2805 = vdwg.mxu0
    %2806 = vst [vmem:[#allocation11] sm:$0xff] %v2802
    %2807 = vst [vmem:[#allocation11 + $0x8] sm:$0xff] %v2804
    // Predicated region
    $region58: #{tpu_custom_call.1} parent=1 // pred_check
      _
    $region59: #{tpu_custom_call.1} parent=1 // pred_check_branch
      %2809 = sbr.rel (0) target = $region61
    $region60: #{tpu_custom_call.1} parent=1 // pred_region
      %2811 = vsyncadd [#allocation4], 0
      %s2812 = sshll.u32 [#allocation11], 4
      %s2813 = int_to_ptr.vmem [resolvable:$true] %s2812
      %s2814 = sshll.u32 %s9, 4
      %s2815 = int_to_ptr.hbm [resolvable:$true] %s2814
      %2820 = dma.vmem_to_hbm [thread:$0]  %s2813, 256, %s2815, [#allocation4], 128, 128, 8
    $region61: #{tpu_custom_call.1} parent=1 // pred_fallthru
      _
    // Predicated region
    $region62: #{tpu_custom_call.1} parent=1 // pred_check
      _
    $region63: #{tpu_custom_call.1} parent=1 // pred_check_branch
      %2822 = sbr.rel (0) target = $region65
    $region64: #{tpu_custom_call.1} parent=1 // pred_region
      %2824 = dma.done [#allocation4], 256
    $region65: #{tpu_custom_call.1} parent=1 // pred_fallthru
      _
    %2825 = vsyncpa [#allocation3], 1
    %2826 = vsyncpa [#allocation6], 1
    %2827 = vsyncpa [#allocation9], 1
    %2828 = vsyncpa [#allocation4], 1

</llo_original>
